<compile_context>
chip_gen: v6e
topology: v6e:2x2x1
jax: 0.10.0
libtpu: 0.0.40
codegen_flags: <defaults>
</compile_context>

<pallas_src>
import functools

import jax
import jax.numpy as jnp
import numpy as np
from jax import lax
from jax.experimental import pallas as pl
from jax.experimental.pallas import tpu as pltpu

EPS = 1e-5


def _band_weights(w_hwio, W):
    """(3, 3, Ci, Co) HWIO conv weight -> (3, W*Ci, W*Co) banded matrices.

    band[k, w_in*Ci + ci, w_out*Co + co] = w_hwio[k, w_in - w_out + 1, ci, co]
    for |w_in - w_out| <= 1, else 0.  Folds the kw tap and the Ci contraction into a
    single MXU contraction dim and implements the zero padding along W.
    """
    _, _, ci, co = w_hwio.shape
    w_in = jnp.arange(W)[:, None]
    w_out = jnp.arange(W)[None, :]
    kw = w_in - w_out + 1                                   # (W, W)
    valid = (kw >= 0) & (kw <= 2)
    g = w_hwio[:, jnp.clip(kw, 0, 2)]                       # (3, W, W, Ci, Co)
    g = jnp.where(valid[None, :, :, None, None], g, 0.0)
    return jnp.transpose(g, (0, 1, 3, 2, 4)).reshape(3, W * ci, W * co)


def _conv3x3_banded(x_cdt, wband_ref, valid_m, valid_p, nh):
    """3x3 conv on a compute-dtype (N*H, W*Ci) slab -> (N*H, W*Co) f32 accumulator.

    wband_ref[k] is the dh = k-1 tap (kw/Ci already folded in).  All three matmuls run
    on the SAME un-shifted slab (bf16 operands / f32 accumulation); the kh shift is a
    sublane pltpu.roll of the f32 result plus a per-row mask, which also implements the
    zero padding in H and blocks leakage across batch-sample boundaries.
    """
    acc = jnp.dot(x_cdt, wband_ref[1], preferred_element_type=jnp.float32)   # dh =  0
    z_m = jnp.dot(x_cdt, wband_ref[0], preferred_element_type=jnp.float32)   # dh = -1
    z_p = jnp.dot(x_cdt, wband_ref[2], preferred_element_type=jnp.float32)   # dh = +1
    # out[r] needs z_m[r-1]: roll down by 1; valid only where h-1 >= 0.
    acc = acc + jnp.where(valid_m, pltpu.roll(z_m, shift=1, axis=0), 0.0)
    # out[r] needs z_p[r+1]: roll up by 1 (== shift nh-1); valid only where h+1 < H.
    acc = acc + jnp.where(valid_p, pltpu.roll(z_p, shift=nh - 1, axis=0), 0.0)
    return acc


def _bn_train(y, gamma, beta, fold, fold_t, inv_count):
    """Training-mode BN on a (N*H, W*C) f32 slab; per-channel batch stats, single pass.

    [sum; sumsq] and [scale; shift] are each one small MXU matmul (merged from two).
    """
    s1 = jnp.sum(y, axis=0, keepdims=True)                         # (1, W*C)
    s2 = jnp.sum(y * y, axis=0, keepdims=True)                     # (1, W*C)
    stats = jnp.dot(jnp.concatenate([s1, s2], axis=0), fold,
                    preferred_element_type=jnp.float32) * inv_count  # (2, C)
    mean = stats[0:1]
    var = jnp.maximum(stats[1:2] - mean * mean, 0.0)               # biased var, clamp >= 0
    scale = gamma * lax.rsqrt(var + EPS)                           # hoisted gamma*inv_std
    shift = beta - mean * scale
    rows = jnp.dot(jnp.concatenate([scale, shift], axis=0), fold_t,
                   preferred_element_type=jnp.float32)             # (2, W*C)
    return y * rows[0:1] + rows[1:2]


def basic_block_kernel(x_ref, w1_ref, w2_ref, bnp_ref, fold_ref, fold_t_ref,
                       out_ref, *, H, cdt):
    nh = x_ref.shape[0]
    cout = fold_ref.shape[-1]
    W = out_ref.shape[-1] // cout
    inv_count = 1.0 / float(nh * W)

    fold = fold_ref[...]
    fold_t = fold_t_ref[...]
    bnp = bnp_ref[...]                                   # (4, Cout): [g1, b1, g2, b2]
    g1, b1, g2, b2 = bnp[0:1], bnp[1:2], bnp[2:3], bnp[3:4]

    # Row-validity masks for the +/-1 kh taps: computed ONCE, reused by both convs.
    h = lax.broadcasted_iota(jnp.int32, (nh, 1), 0) % H
    valid_m = h >= 1            # output row pulls from x[h-1]
    valid_p = h <= H - 2        # output row pulls from x[h+1]

    # conv1 -> bn1 (batch stats) -> relu     (input already in compute dtype: no cast)
    y = _conv3x3_banded(x_ref[...], w1_ref, valid_m, valid_p, nh)
    y = _bn_train(y, g1, b1, fold, fold_t, inv_count)
    y = jnp.maximum(y, 0.0)

    # conv2 -> bn2 (batch stats) -> relu6    (one cast; intermediate never leaves vregs)
    y = _conv3x3_banded(y.astype(cdt), w2_ref, valid_m, valid_p, nh)
    y = _bn_train(y, g2, b2, fold, fold_t, inv_count)
    y = jnp.clip(y, 0.0, 6.0)

    out_ref[...] = y.astype(out_ref.dtype)   # (N*H, W*Cout): 128-lane-dense store


def basic_block_forward(x_nchw, params, compute_dtype=jnp.bfloat16):
    """Fused BasicBlock forward.  x_nchw: (N, Cin, H, W) -> (N, Cout, H, W)."""
    w1, g1, b1, w2, g2, b2 = params
    N, Cin, H, W = x_nchw.shape
    Cout = w1.shape[-1]
    NH = N * H

    # NHWC flattened to lane-dense (rows=(n,h), lanes=(w,c)), already in compute dtype
    # (halves the input DMA).  No jnp.pad -- the spatial zero padding is folded into the
    # kernel (row masks + band structure).
    x2d = (jnp.transpose(x_nchw, (0, 2, 3, 1))
           .reshape(NH, W * Cin)
           .astype(compute_dtype))

    wband1 = _band_weights(w1.astype(jnp.float32), W).astype(compute_dtype)  # (3, W*Cin, W*Cout)
    wband2 = _band_weights(w2.astype(jnp.float32), W).astype(compute_dtype)  # (3, W*Cout, W*Cout)

    fold = jnp.tile(jnp.eye(Cout, dtype=jnp.float32), (W, 1))   # (W*Cout, Cout) 0/1 fold
    fold_t = jnp.transpose(fold)                                # (Cout, W*Cout)

    # Pack the four per-channel BN params into a single (4, Cout) input block.
    bnp = jnp.stack([g1, b1, g2, b2]).astype(jnp.float32)

    def full(shape):
        return pl.BlockSpec(shape, lambda i: (0,) * len(shape))

    kernel = functools.partial(basic_block_kernel, H=H, cdt=compute_dtype)

    # Output stays f32 for module fidelity; a bf16 out_shape would halve writeback DMA
    # if the consumer accepts it.
    out2d = pl.pallas_call(
        kernel,
        out_shape=jax.ShapeDtypeStruct((NH, W * Cout), jnp.float32),
        grid=(1,),
        in_specs=[full(x2d.shape), full(wband1.shape), full(wband2.shape),
                  full(bnp.shape), full(fold.shape), full(fold_t.shape)],
        out_specs=full((NH, W * Cout)),
        compiler_params=pltpu.CompilerParams(
            dimension_semantics=("arbitrary",)),
    )(x2d, wband1, wband2, bnp, fold, fold_t)

    return jnp.transpose(out2d.reshape(N, H, W, Cout), (0, 3, 1, 2))  # back to NCHW


def ref_forward(x_nchw, params, conv_dtype=jnp.float32):
    """Pure-JAX reference (PyTorch BasicBlock.forward, train-mode BN).

    conv_dtype lets the reference use the same conv-operand quantization as the kernel
    (bf16 multiplies, f32 accumulation); conv_dtype=f32 is the faithful f32 module.
    """
    w1, g1, b1, w2, g2, b2 = params

    def conv(x, w):  # x: NCHW, w: HWIO
        return jax.lax.conv_general_dilated(
            x.astype(conv_dtype), w.astype(conv_dtype),
            window_strides=(1, 1), padding=((1, 1), (1, 1)),
            dimension_numbers=("NCHW", "HWIO", "NCHW"),
            preferred_element_type=jnp.float32)

    def bn(x, g, b):
        mean = jnp.mean(x, axis=(0, 2, 3), keepdims=True)
        var = jnp.mean(jnp.square(x - mean), axis=(0, 2, 3), keepdims=True)
        return ((x - mean) * jax.lax.rsqrt(var + EPS)
                * g.reshape(1, -1, 1, 1) + b.reshape(1, -1, 1, 1))

    y = jnp.maximum(bn(conv(x_nchw, w1), g1, b1), 0.0)   # F.relu
    y = jnp.clip(bn(conv(y, w2), g2, b2), 0.0, 6.0)      # ReLU6
    return y


if __name__ == "__main__":
    N, Cin, Cout, H, W = 2, 4, 8, 16, 16

    key = jax.random.PRNGKey(0)
    kx, kw1, kw2, kg1, kb1, kg2, kb2 = jax.random.split(key, 7)

    x = jax.random.normal(kx, (N, Cin, H, W), dtype=jnp.float32)

    # deterministic synthetic parameters (conv weights HWIO, no bias; BN affine)
    w1 = 0.2 * jax.random.normal(kw1, (3, 3, Cin, Cout), dtype=jnp.float32)
    w2 = 0.2 * jax.random.normal(kw2, (3, 3, Cout, Cout), dtype=jnp.float32)
    g1 = 1.0 + 0.1 * jax.random.normal(kg1, (Cout,), dtype=jnp.float32)
    b1 = 0.05 * jax.random.normal(kb1, (Cout,), dtype=jnp.float32)
    g2 = 1.0 + 0.1 * jax.random.normal(kg2, (Cout,), dtype=jnp.float32)
    b2 = 0.05 * jax.random.normal(kb2, (Cout,), dtype=jnp.float32)
    params = (w1, g1, b1, w2, g2, b2)

    # 1) Production path: bf16 MXU operands, compared against a reference with the same
    #    conv-operand quantization (f32 accumulation on both sides).
    out = jax.block_until_ready(basic_block_forward(x, params))  # bf16 default
    ref = jax.block_until_ready(ref_forward(x, params, conv_dtype=jnp.bfloat16))
    np.testing.assert_allclose(np.asarray(out), np.asarray(ref), rtol=2e-2, atol=2e-2)

    # 2) Strict check: f32 kernel path against the PyTorch-faithful f32 reference.
    out32 = jax.block_until_ready(
        basic_block_forward(x, params, compute_dtype=jnp.float32))
    ref32 = jax.block_until_ready(ref_forward(x, params, conv_dtype=jnp.float32))
    np.testing.assert_allclose(np.asarray(out32), np.asarray(ref32),
                               rtol=1e-4, atol=1e-4)

    assert out.shape == (N, Cout, H, W)
    print("KERNEL_OK")
</pallas_src>

<mosaic_0001>
module attributes {stable_mosaic.version = 11 : i64} {
  func.func @basic_block_kernel(%arg0: i32, %arg1: memref<32x64xbf16, #tpu.memory_space<vmem>>, %arg2: memref<3x64x128xbf16, #tpu.memory_space<vmem>>, %arg3: memref<3x128x128xbf16, #tpu.memory_space<vmem>>, %arg4: memref<4x8xf32, #tpu.memory_space<vmem>>, %arg5: memref<128x8xf32, #tpu.memory_space<vmem>>, %arg6: memref<8x128xf32, #tpu.memory_space<vmem>>, %arg7: memref<32x128xf32, #tpu.memory_space<vmem>>) attributes {dimension_semantics = [#tpu.dimension_semantics<arbitrary>], iteration_bounds = array<i64: 1>, scalar_prefetch = 0 : i64, scratch_operands = 0 : i64, tpu.core_type = #tpu.core_type<tc>, window_params = [{pipeline_mode = #tpu.pipeline_mode<synchronous>, transform_indices = @transform_0, window_bounds = array<i64: 32, 64>}, {pipeline_mode = #tpu.pipeline_mode<synchronous>, transform_indices = @transform_1, window_bounds = array<i64: 3, 64, 128>}, {pipeline_mode = #tpu.pipeline_mode<synchronous>, transform_indices = @transform_2, window_bounds = array<i64: 3, 128, 128>}, {pipeline_mode = #tpu.pipeline_mode<synchronous>, transform_indices = @transform_3, window_bounds = array<i64: 4, 8>}, {pipeline_mode = #tpu.pipeline_mode<synchronous>, transform_indices = @transform_4, window_bounds = array<i64: 128, 8>}, {pipeline_mode = #tpu.pipeline_mode<synchronous>, transform_indices = @transform_5, window_bounds = array<i64: 8, 128>}, {pipeline_mode = #tpu.pipeline_mode<synchronous>, transform_indices = @transform_6, window_bounds = array<i64: 32, 128>}]} {
    %c0 = arith.constant 0 : index
    %c0_0 = arith.constant 0 : index
    %0 = vector.load %arg5[%c0, %c0_0] : memref<128x8xf32, #tpu.memory_space<vmem>>, vector<128x8xf32>
    %c0_1 = arith.constant 0 : index
    %c0_2 = arith.constant 0 : index
    %1 = vector.load %arg6[%c0_1, %c0_2] : memref<8x128xf32, #tpu.memory_space<vmem>>, vector<8x128xf32>
    %c0_3 = arith.constant 0 : index
    %c0_4 = arith.constant 0 : index
    %2 = vector.load %arg4[%c0_3, %c0_4] : memref<4x8xf32, #tpu.memory_space<vmem>>, vector<4x8xf32>
    %3 = vector.extract_strided_slice %2 {offsets = [0, 0], sizes = [1, 8], strides = [1, 1]} : vector<4x8xf32> to vector<1x8xf32>
    %4 = vector.extract_strided_slice %2 {offsets = [1, 0], sizes = [1, 8], strides = [1, 1]} : vector<4x8xf32> to vector<1x8xf32>
    %5 = vector.extract_strided_slice %2 {offsets = [2, 0], sizes = [1, 8], strides = [1, 1]} : vector<4x8xf32> to vector<1x8xf32>
    %6 = vector.extract_strided_slice %2 {offsets = [3, 0], sizes = [1, 8], strides = [1, 1]} : vector<4x8xf32> to vector<1x8xf32>
    %7 = tpu.iota {dimensions = array<i32: 0>} : vector<32x1xi32>
    %c16_i32 = arith.constant 16 : i32
    %c0_i32 = arith.constant 0 : i32
    %8 = arith.cmpi eq, %c16_i32, %c0_i32 : i32
    %c1_i32 = arith.constant 1 : i32
    %9 = arith.select %8, %c1_i32, %c16_i32 : i32
    %10 = vector.broadcast %9 : i32 to vector<32x1xi32>
    %11 = arith.remsi %7, %10 : vector<32x1xi32>
    %c0_i32_5 = arith.constant 0 : i32
    %12 = vector.broadcast %c0_i32_5 : i32 to vector<32x1xi32>
    %13 = arith.cmpi ne, %11, %12 : vector<32x1xi32>
    %c0_i32_6 = arith.constant 0 : i32
    %14 = vector.broadcast %c0_i32_6 : i32 to vector<32x1xi32>
    %15 = arith.cmpi slt, %11, %14 : vector<32x1xi32>
    %c0_i32_7 = arith.constant 0 : i32
    %16 = arith.cmpi slt, %9, %c0_i32_7 : i32
    %17 = vector.broadcast %16 : i1 to vector<32x1xi1>
    %18 = vector.broadcast %17 : vector<32x1xi1> to vector<32x1xi1>
    %19 = arith.xori %15, %18 : vector<32x1xi1>
    %20 = arith.andi %19, %13 : vector<32x1xi1>
    %21 = vector.broadcast %9 : i32 to vector<32x1xi32>
    %22 = arith.addi %11, %21 : vector<32x1xi32>
    %23 = arith.select %20, %22, %11 : vector<32x1xi1>, vector<32x1xi32>
    %c1_i32_8 = arith.constant 1 : i32
    %24 = vector.broadcast %c1_i32_8 : i32 to vector<32x1xi32>
    %25 = arith.cmpi sge, %23, %24 : vector<32x1xi32>
    %c14_i32 = arith.constant 14 : i32
    %26 = vector.broadcast %c14_i32 : i32 to vector<32x1xi32>
    %27 = arith.cmpi sle, %23, %26 : vector<32x1xi32>
    %c0_9 = arith.constant 0 : index
    %c0_10 = arith.constant 0 : index
    %28 = vector.load %arg1[%c0_9, %c0_10] : memref<32x64xbf16, #tpu.memory_space<vmem>>, vector<32x64xbf16>
    %c1 = arith.constant 1 : index
    %c0_11 = arith.constant 0 : index
    %c0_12 = arith.constant 0 : index
    %29 = vector.load %arg2[%c1, %c0_11, %c0_12] : memref<3x64x128xbf16, #tpu.memory_space<vmem>>, vector<1x64x128xbf16>
    %30 = vector.shape_cast %29 : vector<1x64x128xbf16> to vector<64x128xbf16>
    %cst = arith.constant dense<0.000000e+00> : vector<32x128xf32>
    %31 = tpu.matmul %28, %30, %cst {dimension_numbers = #tpu.dot_dimension_numbers<[1], [0], [0], [1], [0, 0, 1, 1], [], []>} : vector<32x64xbf16>, vector<64x128xbf16>, vector<32x128xf32> -> vector<32x128xf32>
    %c0_13 = arith.constant 0 : index
    %c0_14 = arith.constant 0 : index
    %c0_15 = arith.constant 0 : index
    %32 = vector.load %arg2[%c0_13, %c0_14, %c0_15] : memref<3x64x128xbf16, #tpu.memory_space<vmem>>, vector<1x64x128xbf16>
    %33 = vector.shape_cast %32 : vector<1x64x128xbf16> to vector<64x128xbf16>
    %cst_16 = arith.constant dense<0.000000e+00> : vector<32x128xf32>
    %34 = tpu.matmul %28, %33, %cst_16 {dimension_numbers = #tpu.dot_dimension_numbers<[1], [0], [0], [1], [0, 0, 1, 1], [], []>} : vector<32x64xbf16>, vector<64x128xbf16>, vector<32x128xf32> -> vector<32x128xf32>
    %c2 = arith.constant 2 : index
    %c0_17 = arith.constant 0 : index
    %c0_18 = arith.constant 0 : index
    %35 = vector.load %arg2[%c2, %c0_17, %c0_18] : memref<3x64x128xbf16, #tpu.memory_space<vmem>>, vector<1x64x128xbf16>
    %36 = vector.shape_cast %35 : vector<1x64x128xbf16> to vector<64x128xbf16>
    %cst_19 = arith.constant dense<0.000000e+00> : vector<32x128xf32>
    %37 = tpu.matmul %28, %36, %cst_19 {dimension_numbers = #tpu.dot_dimension_numbers<[1], [0], [0], [1], [0, 0, 1, 1], [], []>} : vector<32x64xbf16>, vector<64x128xbf16>, vector<32x128xf32> -> vector<32x128xf32>
    %c1_i32_20 = arith.constant 1 : i32
    %38 = tpu.dynamic_rotate %34 by %c1_i32_20 dim 0 : vector<32x128xf32>, i32 -> vector<32x128xf32>
    %cst_21 = arith.constant 0.000000e+00 : f32
    %39 = vector.shape_cast %25 : vector<32x1xi1> to vector<32x1xi1>
    %40 = vector.broadcast %39 : vector<32x1xi1> to vector<32x128xi1>
    %41 = vector.broadcast %cst_21 : f32 to vector<32x128xf32>
    %42 = arith.select %40, %38, %41 : vector<32x128xi1>, vector<32x128xf32>
    %43 = arith.addf %31, %42 : vector<32x128xf32>
    %c31_i32 = arith.constant 31 : i32
    %44 = tpu.dynamic_rotate %37 by %c31_i32 dim 0 : vector<32x128xf32>, i32 -> vector<32x128xf32>
    %cst_22 = arith.constant 0.000000e+00 : f32
    %45 = vector.shape_cast %27 : vector<32x1xi1> to vector<32x1xi1>
    %46 = vector.broadcast %45 : vector<32x1xi1> to vector<32x128xi1>
    %47 = vector.broadcast %cst_22 : f32 to vector<32x128xf32>
    %48 = arith.select %46, %44, %47 : vector<32x128xi1>, vector<32x128xf32>
    %49 = arith.addf %43, %48 : vector<32x128xf32>
    %cst_23 = arith.constant dense<0.000000e+00> : vector<128xf32>
    %50 = vector.multi_reduction <add>, %49, %cst_23 [0] : vector<32x128xf32> to vector<128xf32>
    %51 = vector.shape_cast %50 : vector<128xf32> to vector<1x128xf32>
    %52 = arith.mulf %49, %49 : vector<32x128xf32>
    %cst_24 = arith.constant dense<0.000000e+00> : vector<128xf32>
    %53 = vector.multi_reduction <add>, %52, %cst_24 [0] : vector<32x128xf32> to vector<128xf32>
    %54 = vector.shape_cast %53 : vector<128xf32> to vector<1x128xf32>
    %55 = tpu.concatenate %51, %54 in 0 : vector<1x128xf32>, vector<1x128xf32> -> vector<2x128xf32>
    %cst_25 = arith.constant dense<0.000000e+00> : vector<2x8xf32>
    %56 = tpu.matmul %55, %0, %cst_25 {dimension_numbers = #tpu.dot_dimension_numbers<[1], [0], [0], [1], [0, 0, 1, 1], [], []>} : vector<2x128xf32>, vector<128x8xf32>, vector<2x8xf32> -> vector<2x8xf32>
    %cst_26 = arith.constant 0.001953125 : f32
    %57 = vector.broadcast %cst_26 : f32 to vector<2x8xf32>
    %58 = arith.mulf %56, %57 : vector<2x8xf32>
    %59 = vector.extract_strided_slice %58 {offsets = [0, 0], sizes = [1, 8], strides = [1, 1]} : vector<2x8xf32> to vector<1x8xf32>
    %60 = vector.extract_strided_slice %58 {offsets = [1, 0], sizes = [1, 8], strides = [1, 1]} : vector<2x8xf32> to vector<1x8xf32>
    %61 = arith.mulf %59, %59 : vector<1x8xf32>
    %62 = arith.subf %60, %61 : vector<1x8xf32>
    %cst_27 = arith.constant 0.000000e+00 : f32
    %63 = vector.broadcast %cst_27 : f32 to vector<1x8xf32>
    %64 = arith.maximumf %62, %63 : vector<1x8xf32>
    %cst_28 = arith.constant 9.99999974E-6 : f32
    %65 = vector.broadcast %cst_28 : f32 to vector<1x8xf32>
    %66 = arith.addf %64, %65 : vector<1x8xf32>
    %67 = math.rsqrt %66 : vector<1x8xf32>
    %68 = arith.mulf %3, %67 : vector<1x8xf32>
    %69 = arith.mulf %59, %68 : vector<1x8xf32>
    %70 = arith.subf %4, %69 : vector<1x8xf32>
    %71 = tpu.concatenate %68, %70 in 0 : vector<1x8xf32>, vector<1x8xf32> -> vector<2x8xf32>
    %cst_29 = arith.constant dense<0.000000e+00> : vector<2x128xf32>
    %72 = tpu.matmul %71, %1, %cst_29 {dimension_numbers = #tpu.dot_dimension_numbers<[1], [0], [0], [1], [0, 0, 1, 1], [], []>} : vector<2x8xf32>, vector<8x128xf32>, vector<2x128xf32> -> vector<2x128xf32>
    %73 = vector.extract_strided_slice %72 {offsets = [0, 0], sizes = [1, 128], strides = [1, 1]} : vector<2x128xf32> to vector<1x128xf32>
    %74 = vector.broadcast %73 : vector<1x128xf32> to vector<32x128xf32>
    %75 = arith.mulf %49, %74 : vector<32x128xf32>
    %76 = vector.extract_strided_slice %72 {offsets = [1, 0], sizes = [1, 128], strides = [1, 1]} : vector<2x128xf32> to vector<1x128xf32>
    %77 = vector.broadcast %76 : vector<1x128xf32> to vector<32x128xf32>
    %78 = arith.addf %75, %77 : vector<32x128xf32>
    %cst_30 = arith.constant 0.000000e+00 : f32
    %79 = vector.broadcast %cst_30 : f32 to vector<32x128xf32>
    %80 = arith.maximumf %78, %79 : vector<32x128xf32>
    %81 = arith.truncf %80 : vector<32x128xf32> to vector<32x128xbf16>
    %c1_31 = arith.constant 1 : index
    %c0_32 = arith.constant 0 : index
    %c0_33 = arith.constant 0 : index
    %82 = vector.load %arg3[%c1_31, %c0_32, %c0_33] : memref<3x128x128xbf16, #tpu.memory_space<vmem>>, vector<1x128x128xbf16>
    %83 = vector.shape_cast %82 : vector<1x128x128xbf16> to vector<128x128xbf16>
    %cst_34 = arith.constant dense<0.000000e+00> : vector<32x128xf32>
    %84 = tpu.matmul %81, %83, %cst_34 {dimension_numbers = #tpu.dot_dimension_numbers<[1], [0], [0], [1], [0, 0, 1, 1], [], []>} : vector<32x128xbf16>, vector<128x128xbf16>, vector<32x128xf32> -> vector<32x128xf32>
    %c0_35 = arith.constant 0 : index
    %c0_36 = arith.constant 0 : index
    %c0_37 = arith.constant 0 : index
    %85 = vector.load %arg3[%c0_35, %c0_36, %c0_37] : memref<3x128x128xbf16, #tpu.memory_space<vmem>>, vector<1x128x128xbf16>
    %86 = vector.shape_cast %85 : vector<1x128x128xbf16> to vector<128x128xbf16>
    %cst_38 = arith.constant dense<0.000000e+00> : vector<32x128xf32>
    %87 = tpu.matmul %81, %86, %cst_38 {dimension_numbers = #tpu.dot_dimension_numbers<[1], [0], [0], [1], [0, 0, 1, 1], [], []>} : vector<32x128xbf16>, vector<128x128xbf16>, vector<32x128xf32> -> vector<32x128xf32>
    %c2_39 = arith.constant 2 : index
    %c0_40 = arith.constant 0 : index
    %c0_41 = arith.constant 0 : index
    %88 = vector.load %arg3[%c2_39, %c0_40, %c0_41] : memref<3x128x128xbf16, #tpu.memory_space<vmem>>, vector<1x128x128xbf16>
    %89 = vector.shape_cast %88 : vector<1x128x128xbf16> to vector<128x128xbf16>
    %cst_42 = arith.constant dense<0.000000e+00> : vector<32x128xf32>
    %90 = tpu.matmul %81, %89, %cst_42 {dimension_numbers = #tpu.dot_dimension_numbers<[1], [0], [0], [1], [0, 0, 1, 1], [], []>} : vector<32x128xbf16>, vector<128x128xbf16>, vector<32x128xf32> -> vector<32x128xf32>
    %c1_i32_43 = arith.constant 1 : i32
    %91 = tpu.dynamic_rotate %87 by %c1_i32_43 dim 0 : vector<32x128xf32>, i32 -> vector<32x128xf32>
    %cst_44 = arith.constant 0.000000e+00 : f32
    %92 = vector.shape_cast %25 : vector<32x1xi1> to vector<32x1xi1>
    %93 = vector.broadcast %92 : vector<32x1xi1> to vector<32x128xi1>
    %94 = vector.broadcast %cst_44 : f32 to vector<32x128xf32>
    %95 = arith.select %93, %91, %94 : vector<32x128xi1>, vector<32x128xf32>
    %96 = arith.addf %84, %95 : vector<32x128xf32>
    %c31_i32_45 = arith.constant 31 : i32
    %97 = tpu.dynamic_rotate %90 by %c31_i32_45 dim 0 : vector<32x128xf32>, i32 -> vector<32x128xf32>
    %cst_46 = arith.constant 0.000000e+00 : f32
    %98 = vector.shape_cast %27 : vector<32x1xi1> to vector<32x1xi1>
    %99 = vector.broadcast %98 : vector<32x1xi1> to vector<32x128xi1>
    %100 = vector.broadcast %cst_46 : f32 to vector<32x128xf32>
    %101 = arith.select %99, %97, %100 : vector<32x128xi1>, vector<32x128xf32>
    %102 = arith.addf %96, %101 : vector<32x128xf32>
    %cst_47 = arith.constant dense<0.000000e+00> : vector<128xf32>
    %103 = vector.multi_reduction <add>, %102, %cst_47 [0] : vector<32x128xf32> to vector<128xf32>
    %104 = vector.shape_cast %103 : vector<128xf32> to vector<1x128xf32>
    %105 = arith.mulf %102, %102 : vector<32x128xf32>
    %cst_48 = arith.constant dense<0.000000e+00> : vector<128xf32>
    %106 = vector.multi_reduction <add>, %105, %cst_48 [0] : vector<32x128xf32> to vector<128xf32>
    %107 = vector.shape_cast %106 : vector<128xf32> to vector<1x128xf32>
    %108 = tpu.concatenate %104, %107 in 0 : vector<1x128xf32>, vector<1x128xf32> -> vector<2x128xf32>
    %cst_49 = arith.constant dense<0.000000e+00> : vector<2x8xf32>
    %109 = tpu.matmul %108, %0, %cst_49 {dimension_numbers = #tpu.dot_dimension_numbers<[1], [0], [0], [1], [0, 0, 1, 1], [], []>} : vector<2x128xf32>, vector<128x8xf32>, vector<2x8xf32> -> vector<2x8xf32>
    %cst_50 = arith.constant 0.001953125 : f32
    %110 = vector.broadcast %cst_50 : f32 to vector<2x8xf32>
    %111 = arith.mulf %109, %110 : vector<2x8xf32>
    %112 = vector.extract_strided_slice %111 {offsets = [0, 0], sizes = [1, 8], strides = [1, 1]} : vector<2x8xf32> to vector<1x8xf32>
    %113 = vector.extract_strided_slice %111 {offsets = [1, 0], sizes = [1, 8], strides = [1, 1]} : vector<2x8xf32> to vector<1x8xf32>
    %114 = arith.mulf %112, %112 : vector<1x8xf32>
    %115 = arith.subf %113, %114 : vector<1x8xf32>
    %cst_51 = arith.constant 0.000000e+00 : f32
    %116 = vector.broadcast %cst_51 : f32 to vector<1x8xf32>
    %117 = arith.maximumf %115, %116 : vector<1x8xf32>
    %cst_52 = arith.constant 9.99999974E-6 : f32
    %118 = vector.broadcast %cst_52 : f32 to vector<1x8xf32>
    %119 = arith.addf %117, %118 : vector<1x8xf32>
    %120 = math.rsqrt %119 : vector<1x8xf32>
    %121 = arith.mulf %5, %120 : vector<1x8xf32>
    %122 = arith.mulf %112, %121 : vector<1x8xf32>
    %123 = arith.subf %6, %122 : vector<1x8xf32>
    %124 = tpu.concatenate %121, %123 in 0 : vector<1x8xf32>, vector<1x8xf32> -> vector<2x8xf32>
    %cst_53 = arith.constant dense<0.000000e+00> : vector<2x128xf32>
    %125 = tpu.matmul %124, %1, %cst_53 {dimension_numbers = #tpu.dot_dimension_numbers<[1], [0], [0], [1], [0, 0, 1, 1], [], []>} : vector<2x8xf32>, vector<8x128xf32>, vector<2x128xf32> -> vector<2x128xf32>
    %126 = vector.extract_strided_slice %125 {offsets = [0, 0], sizes = [1, 128], strides = [1, 1]} : vector<2x128xf32> to vector<1x128xf32>
    %127 = vector.broadcast %126 : vector<1x128xf32> to vector<32x128xf32>
    %128 = arith.mulf %102, %127 : vector<32x128xf32>
    %129 = vector.extract_strided_slice %125 {offsets = [1, 0], sizes = [1, 128], strides = [1, 1]} : vector<2x128xf32> to vector<1x128xf32>
    %130 = vector.broadcast %129 : vector<1x128xf32> to vector<32x128xf32>
    %131 = arith.addf %128, %130 : vector<32x128xf32>
    %cst_54 = arith.constant 0.000000e+00 : f32
    %cst_55 = arith.constant 6.000000e+00 : f32
    %132 = vector.broadcast %cst_54 : f32 to vector<32x128xf32>
    %133 = arith.maximumf %132, %131 : vector<32x128xf32>
    %134 = vector.broadcast %cst_55 : f32 to vector<32x128xf32>
    %135 = arith.minimumf %134, %133 : vector<32x128xf32>
    %c0_56 = arith.constant 0 : index
    %c0_57 = arith.constant 0 : index
    %136 = vector.load %arg7[%c0_56, %c0_57] : memref<32x128xf32, #tpu.memory_space<vmem>>, vector<32x128xf32>
    tpu.vector_store %arg7[%c0_56, %c0_57], %135 {strides = array<i32>} : memref<32x128xf32, #tpu.memory_space<vmem>>, vector<32x128xf32>,
    return
  }
  func.func @transform_0(%arg0: i32) -> (i32, i32) {
    %c0_i32 = arith.constant 0 : i32
    %c0_i32_0 = arith.constant 0 : i32
    %c0_i32_1 = arith.constant 0 : i32
    return %c0_i32, %c0_i32_0 : i32, i32
  }
  func.func @transform_1(%arg0: i32) -> (i32, i32, i32) {
    %c0_i32 = arith.constant 0 : i32
    %c0_i32_0 = arith.constant 0 : i32
    %c0_i32_1 = arith.constant 0 : i32
    %c0_i32_2 = arith.constant 0 : i32
    return %c0_i32, %c0_i32_0, %c0_i32_1 : i32, i32, i32
  }
  func.func @transform_2(%arg0: i32) -> (i32, i32, i32) {
    %c0_i32 = arith.constant 0 : i32
    %c0_i32_0 = arith.constant 0 : i32
    %c0_i32_1 = arith.constant 0 : i32
    %c0_i32_2 = arith.constant 0 : i32
    return %c0_i32, %c0_i32_0, %c0_i32_1 : i32, i32, i32
  }
  func.func @transform_3(%arg0: i32) -> (i32, i32) {
    %c0_i32 = arith.constant 0 : i32
    %c0_i32_0 = arith.constant 0 : i32
    %c0_i32_1 = arith.constant 0 : i32
    return %c0_i32, %c0_i32_0 : i32, i32
  }
  func.func @transform_4(%arg0: i32) -> (i32, i32) {
    %c0_i32 = arith.constant 0 : i32
    %c0_i32_0 = arith.constant 0 : i32
    %c0_i32_1 = arith.constant 0 : i32
    return %c0_i32, %c0_i32_0 : i32, i32
  }
  func.func @transform_5(%arg0: i32) -> (i32, i32) {
    %c0_i32 = arith.constant 0 : i32
    %c0_i32_0 = arith.constant 0 : i32
    %c0_i32_1 = arith.constant 0 : i32
    return %c0_i32, %c0_i32_0 : i32, i32
  }
  func.func @transform_6(%arg0: i32) -> (i32, i32) {
    %c0_i32 = arith.constant 0 : i32
    %c0_i32_0 = arith.constant 0 : i32
    %c0_i32_1 = arith.constant 0 : i32
    return %c0_i32, %c0_i32_0 : i32, i32
  }
}

</mosaic_0001>

<llo_original>
// kernel: tpu_custom_call.1
$region0: #{tpu_custom_call.1}
  #allocation0 [shape = 'u32[]', space=smem, size = 0x4, offset = 0x4, fixed_abs, tag = 'smem constant byte address 0x4 - core index']
  #allocation1 [shape = 'u32[144,128]{1,0:T(1,128)}', space=vmem, size = 0x12000, scoped, tag = 'internal scratch']
  %s0 = inlined_call_operand.vmem [shape: bf16[32,64], index: 0, kind: input, shape index: {}]
  %s1 = inlined_call_operand.vmem [shape: bf16[3,64,128], index: 1, kind: input, shape index: {}]
  %s2 = inlined_call_operand.hbm [shape: bf16[3,128,128], index: 2, kind: input, shape index: {}]
  %s3 = inlined_call_operand.vmem [shape: f32[4,8], index: 3, kind: input, shape index: {}]
  %s4 = inlined_call_operand.vmem [shape: f32[128,8], index: 4, kind: input, shape index: {}]
  %s5 = inlined_call_operand.vmem [shape: f32[8,128], index: 5, kind: input, shape index: {}]
  %s6 = inlined_call_operand.hbm [shape: f32[32,128], index: 6, kind: output, shape index: {}]
  %s7 = sld [smem:[#allocation0]]
  $region38: #{tpu_custom_call.1} parent=0
    _
  %s9 = ssub.s32 1, %s7
  %s10 = scalar_select 0, %s9, %s7
  $region1: #{tpu_custom_call.1} parent=0
    #allocation2 [shape = 'u8[98304]{0}', space=vmem, size = 0x18000, scoped, tag = 'input window, operand 2, single buffered']
    #allocation3 [shape = 's32[1]{0}', space=sflag, size = 0x4, scoped, tag = 'scoped memory for tpu_custom_call.1']
    #allocation4 [shape = 's32[1]{0}', space=sflag, size = 0x4, scoped, tag = 'scoped memory for tpu_custom_call.1']
    #allocation5 [shape = 'u8[16384]{0}', space=vmem, size = 0x4000, scoped, tag = 'output window, operand 0, single buffered']
    %11 = vsyncpa [#allocation3], 0
    %12 = vsyncpa [#allocation4], 0
    // Predicated region
    $region2: #{tpu_custom_call.1} parent=1 // pred_check
      _
    $region3: #{tpu_custom_call.1} parent=1 // pred_check_branch
      %14 = sbr.rel (0) target = $region5
    $region4: #{tpu_custom_call.1} parent=1 // pred_region
      _
    $region5: #{tpu_custom_call.1} parent=1 // pred_fallthru
      _
    // Predicated region
    $region6: #{tpu_custom_call.1} parent=1 // pred_check
      _
    $region7: #{tpu_custom_call.1} parent=1 // pred_check_branch
      %16 = sbr.rel (0) target = $region9
    $region8: #{tpu_custom_call.1} parent=1 // pred_region
      _
    $region9: #{tpu_custom_call.1} parent=1 // pred_fallthru
      _
    // Predicated region
    $region10: #{tpu_custom_call.1} parent=1 // pred_check
      _
    $region11: #{tpu_custom_call.1} parent=1 // pred_check_branch
      %18 = sbr.rel (0) target = $region13
    $region12: #{tpu_custom_call.1} parent=1 // pred_region
      %s20 = ssub.s32 3072, 3072
      %21 = vsyncadd [#allocation3], %s20
      %s22 = sshll.u32 [#allocation2], 4
      %s23 = int_to_ptr.vmem [resolvable:$true] %s22
      %28 = dma.hbm_to_vmem [thread:$0]  %s2, 3072, %s23, [#allocation3], 64, 64, 4
    $region13: #{tpu_custom_call.1} parent=1 // pred_fallthru
      _
    // Predicated region
    $region14: #{tpu_custom_call.1} parent=1 // pred_check
      _
    $region15: #{tpu_custom_call.1} parent=1 // pred_check_branch
      %30 = sbr.rel (0) target = $region17
    $region16: #{tpu_custom_call.1} parent=1 // pred_region
      _
    $region17: #{tpu_custom_call.1} parent=1 // pred_fallthru
      _
    // Predicated region
    $region18: #{tpu_custom_call.1} parent=1 // pred_check
      _
    $region19: #{tpu_custom_call.1} parent=1 // pred_check_branch
      %32 = sbr.rel (0) target = $region21
    $region20: #{tpu_custom_call.1} parent=1 // pred_region
      _
    $region21: #{tpu_custom_call.1} parent=1 // pred_fallthru
      _
    // Predicated region
    $region22: #{tpu_custom_call.1} parent=1 // pred_check
      _
    $region23: #{tpu_custom_call.1} parent=1 // pred_check_branch
      %34 = sbr.rel (0) target = $region25
    $region24: #{tpu_custom_call.1} parent=1 // pred_region
      _
    $region25: #{tpu_custom_call.1} parent=1 // pred_fallthru
      _
    // Predicated region
    $region26: #{tpu_custom_call.1} parent=1 // pred_check
      _
    $region27: #{tpu_custom_call.1} parent=1 // pred_check_branch
      %36 = sbr.rel (0) target = $region29
    $region28: #{tpu_custom_call.1} parent=1 // pred_region
      %37 = dma.done [#allocation3], 3072
    $region29: #{tpu_custom_call.1} parent=1 // pred_fallthru
      _
    %v39 = vld [vmem:[%s4] sm:$0xff]
    %v40 = vld [vmem:[%s4 + $0x8] sm:$0xff]
    %v41 = vld [vmem:[%s4 + $0x10] sm:$0xff]
    %v42 = vld [vmem:[%s4 + $0x18] sm:$0xff]
    %v43 = vld [vmem:[%s4 + $0x20] sm:$0xff]
    %v44 = vld [vmem:[%s4 + $0x28] sm:$0xff]
    %v45 = vld [vmem:[%s4 + $0x30] sm:$0xff]
    %v46 = vld [vmem:[%s4 + $0x38] sm:$0xff]
    %v47 = vld [vmem:[%s4 + $0x40] sm:$0xff]
    %v48 = vld [vmem:[%s4 + $0x48] sm:$0xff]
    %v49 = vld [vmem:[%s4 + $0x50] sm:$0xff]
    %v50 = vld [vmem:[%s4 + $0x58] sm:$0xff]
    %v51 = vld [vmem:[%s4 + $0x60] sm:$0xff]
    %v52 = vld [vmem:[%s4 + $0x68] sm:$0xff]
    %v53 = vld [vmem:[%s4 + $0x70] sm:$0xff]
    %v54 = vld [vmem:[%s4 + $0x78] sm:$0xff]
    %v55 = vld [vmem:[%s5] sm:$0xff]
    %v56 = vld [vmem:[%s3] sm:$0xf]
    %v57 = vlaneseq
    %v58 = vshrl.u32 %v57, 7
    %v59 = vadd.s32 %v58, 8
    %v60 = vadd.s32 %v58, 16
    %v61 = vadd.s32 %v58, 24
    %vm62 = vcmp.lt.s32.totalorder %v58, 0
    %v63 = vsub.s32 0, %v58
    %v64 = vsel %vm62, %v63, %v58
    %v65 = vshrl.u32 %v64, 4
    %v66 = vand.u32 %v64, 15
    %v67 = vsub.s32 0, %v66
    %v68 = vsel %vm62, %v67, %v66
    %vm69 = vcmp.lt.s32.totalorder %v59, 0
    %v70 = vsub.s32 0, %v59
    %v71 = vsel %vm69, %v70, %v59
    %v72 = vshrl.u32 %v71, 4
    %v73 = vand.u32 %v71, 15
    %v74 = vsub.s32 0, %v73
    %v75 = vsel %vm69, %v74, %v73
    %vm76 = vcmp.lt.s32.totalorder %v60, 0
    %v77 = vsub.s32 0, %v60
    %v78 = vsel %vm76, %v77, %v60
    %v79 = vshrl.u32 %v78, 4
    %v80 = vand.u32 %v78, 15
    %v81 = vsub.s32 0, %v80
    %v82 = vsel %vm76, %v81, %v80
    %vm83 = vcmp.lt.s32.totalorder %v61, 0
    %v84 = vsub.s32 0, %v61
    %v85 = vsel %vm83, %v84, %v61
    %v86 = vshrl.u32 %v85, 4
    %v87 = vand.u32 %v85, 15
    %v88 = vsub.s32 0, %v87
    %v89 = vsel %vm83, %v88, %v87
    %vm90 = vcmp.ne.s32.totalorder %v68, 0
    %vm91 = vcmp.ne.s32.totalorder %v75, 0
    %vm92 = vcmp.ne.s32.totalorder %v82, 0
    %vm93 = vcmp.ne.s32.totalorder %v89, 0
    %vm94 = vcmp.lt.s32.totalorder %v68, 0
    %vm95 = vcmp.lt.s32.totalorder %v75, 0
    %vm96 = vcmp.lt.s32.totalorder %v82, 0
    %vm97 = vcmp.lt.s32.totalorder %v89, 0
    %vm98 = vmand %vm94, %vm90
    %vm99 = vmand %vm95, %vm91
    %vm100 = vmand %vm96, %vm92
    %vm101 = vmand %vm97, %vm93
    %v102 = vadd.s32 %v68, 16
    %v103 = vadd.s32 %v75, 16
    %v104 = vadd.s32 %v82, 16
    %v105 = vadd.s32 %v89, 16
    %v106 = vsel %vm98, %v102, %v68
    %v107 = vsel %vm99, %v103, %v75
    %v108 = vsel %vm100, %v104, %v82
    %v109 = vsel %vm101, %v105, %v89
    %vm110 = vcmp.ge.s32.totalorder %v106, 1
    %vm111 = vcmp.ge.s32.totalorder %v107, 1
    %vm112 = vcmp.ge.s32.totalorder %v108, 1
    %vm113 = vcmp.ge.s32.totalorder %v109, 1
    %vm114 = vcmp.le.s32.totalorder %v106, 14
    %vm115 = vcmp.le.s32.totalorder %v107, 14
    %vm116 = vcmp.le.s32.totalorder %v108, 14
    %vm117 = vcmp.le.s32.totalorder %v109, 14
    %v118 = vld [vmem:[%s0] sm:$0xf]
    %v119 = vld [vmem:[%s0 + $0x4] sm:$0xf]
    %v120 = vld [vmem:[%s0 + $0x8] sm:$0xf]
    %v121 = vld [vmem:[%s0 + $0xc] sm:$0xf]
    %s122 = scalar_lea.vmem %s1, 32
    %v123 = vld [vmem:[%s122] sm:$0xf]
    %v124 = vld [vmem:[%s122 + $0x4] sm:$0xf]
    %v125 = vld [vmem:[%s122 + $0x8] sm:$0xf]
    %v126 = vld [vmem:[%s122 + $0xc] sm:$0xf]
    %v127 = vld [vmem:[%s122 + $0x10] sm:$0xf]
    %v128 = vld [vmem:[%s122 + $0x14] sm:$0xf]
    %v129 = vld [vmem:[%s122 + $0x18] sm:$0xf]
    %v130 = vld [vmem:[%s122 + $0x1c] sm:$0xf]
    %v131 = vld [vmem:[%s1] sm:$0xf]
    %v132 = vld [vmem:[%s1 + $0x4] sm:$0xf]
    %v133 = vld [vmem:[%s1 + $0x8] sm:$0xf]
    %v134 = vld [vmem:[%s1 + $0xc] sm:$0xf]
    %v135 = vld [vmem:[%s1 + $0x10] sm:$0xf]
    %v136 = vld [vmem:[%s1 + $0x14] sm:$0xf]
    %v137 = vld [vmem:[%s1 + $0x18] sm:$0xf]
    %v138 = vld [vmem:[%s1 + $0x1c] sm:$0xf]
    %v143 = vunpack.c.l.b16 %v118
    %v144 = vunpack.c.l.b16 %v119
    %v145 = vunpack.c.l.b16 %v120
    %v146 = vunpack.c.l.b16 %v121
    %v147 = vpack.c.b16 %v144, %v143
    %v148 = vpack.c.b16 %v146, %v145
    %v157 = vunpack.c.l.b16 %v131
    %v158 = vunpack.c.l.b16 %v132
    %v159 = vunpack.c.l.b16 %v133
    %v160 = vunpack.c.l.b16 %v134
    %v161 = vunpack.c.l.b16 %v135
    %v162 = vunpack.c.l.b16 %v136
    %v163 = vunpack.c.l.b16 %v137
    %v164 = vunpack.c.l.b16 %v138
    %v165 = vpack.c.b16 %v158, %v157
    %v166 = vpack.c.b16 %v160, %v159
    %v167 = vpack.c.b16 %v162, %v161
    %v168 = vpack.c.b16 %v164, %v163
    %vm173 = vcmask 523264
    %v175 = vsel %vm173, %v147, 0
    %v178 = vsel %vm173, %v148, 0
    %180 = vmatprep.subr.bf16.mxu0 0
    %181 = vmatpush1.bf16.msra.mxu0 0
    %182 = vmatprep.subr.bf16.mxu0 0
    %183 = vmatpush1.bf16.msra.mxu0 0
    %184 = vmatprep.subr.bf16.mxu0 0
    %185 = vmatpush1.bf16.msra.mxu0 0
    %186 = vmatprep.subr.bf16.mxu0 0
    %187 = vmatpush1.bf16.msra.mxu0 0
    %188 = vmatprep.subr.bf16.mxu0 0
    %189 = vmatpush1.bf16.msra.mxu0 %v168
    %190 = vmatprep.subr.bf16.mxu0 0
    %191 = vmatpush1.bf16.msra.mxu0 %v167
    %192 = vmatprep.subr.bf16.mxu0 0
    %193 = vmatpush1.bf16.msra.mxu0 %v166
    %194 = vmatprep.subr.bf16.mxu0 0
    %195 = vmatpush1.bf16.msra.mxu0 %v165
    %196 = vmatprep.subr.bf16.mxu0 0
    %197 = vmatpush2.bf16.msra.mxu0 0
    %198 = vmatprep.subr.bf16.mxu0 0
    %199 = vmatpush2.bf16.msra.mxu0 0
    %200 = vmatprep.subr.bf16.mxu0 0
    %201 = vmatpush2.bf16.msra.mxu0 0
    %202 = vmatprep.subr.bf16.mxu0 0
    %203 = vmatpush2.bf16.msra.mxu0 0
    %204 = vmatprep.subr.bf16.mxu0 0
    %205 = vmatpush2.bf16.msra.mxu0 0
    %206 = vmatprep.subr.bf16.mxu0 0
    %207 = vmatpush2.bf16.msra.mxu0 0
    %208 = vmatprep.subr.bf16.mxu0 0
    %209 = vmatpush2.bf16.msra.mxu0 0
    %210 = vmatprep.subr.bf16.mxu0 0
    %211 = vmatpush2.bf16.msra.mxu0 0
    %212 = vmatprep.mubr.bf16.mxu0 0
    %213 = vmatmul.mubr.bf16.gmra.mxu0 %v175
    %v214 = vpop.f32.mrf.mxu0
    %v215 = vadd.f32 0.0, %v214
    %v216 = vpop.f32.mrf.mxu0
    %v217 = vpop.f32.mrf.mxu0
    %v218 = vadd.f32 0.0, %v217
    %v219 = vpop.f32.mrf.mxu0
    %220 = vmatprep.mubr.bf16.mxu0 0
    %221 = vmatmul.mubr.bf16.gmra.mxu0 %v178
    %v222 = vpop.f32.mrf.mxu0
    %v223 = vadd.f32 0.0, %v222
    %v224 = vpop.f32.mrf.mxu0
    %v225 = vpop.f32.mrf.mxu0
    %v226 = vadd.f32 0.0, %v225
    %v227 = vpop.f32.mrf.mxu0
    %228 = vdwg.mxu0
    %s229 = scalar_lea.vmem %s1, 64
    %v230 = vld [vmem:[%s229] sm:$0xf]
    %v231 = vld [vmem:[%s229 + $0x4] sm:$0xf]
    %v232 = vld [vmem:[%s229 + $0x8] sm:$0xf]
    %v233 = vld [vmem:[%s229 + $0xc] sm:$0xf]
    %v234 = vld [vmem:[%s229 + $0x10] sm:$0xf]
    %v235 = vld [vmem:[%s229 + $0x14] sm:$0xf]
    %v236 = vld [vmem:[%s229 + $0x18] sm:$0xf]
    %v237 = vld [vmem:[%s229 + $0x1c] sm:$0xf]
    %v246 = vunpack.c.l.b16 %v230
    %v247 = vunpack.c.l.b16 %v231
    %v248 = vunpack.c.l.b16 %v232
    %v249 = vunpack.c.l.b16 %v233
    %v250 = vunpack.c.l.b16 %v234
    %v251 = vunpack.c.l.b16 %v235
    %v252 = vunpack.c.l.b16 %v236
    %v253 = vunpack.c.l.b16 %v237
    %v254 = vpack.c.b16 %v247, %v246
    %v255 = vpack.c.b16 %v249, %v248
    %v256 = vpack.c.b16 %v251, %v250
    %v257 = vpack.c.b16 %v253, %v252
    %262 = vmatprep.subr.bf16.mxu0 0
    %263 = vmatpush1.bf16.msra.mxu0 0
    %264 = vmatprep.subr.bf16.mxu0 0
    %265 = vmatpush1.bf16.msra.mxu0 0
    %266 = vmatprep.subr.bf16.mxu0 0
    %267 = vmatpush1.bf16.msra.mxu0 0
    %268 = vmatprep.subr.bf16.mxu0 0
    %269 = vmatpush1.bf16.msra.mxu0 0
    %270 = vmatprep.subr.bf16.mxu0 0
    %271 = vmatpush1.bf16.msra.mxu0 %v257
    %272 = vmatprep.subr.bf16.mxu0 0
    %273 = vmatpush1.bf16.msra.mxu0 %v256
    %274 = vmatprep.subr.bf16.mxu0 0
    %275 = vmatpush1.bf16.msra.mxu0 %v255
    %276 = vmatprep.subr.bf16.mxu0 0
    %277 = vmatpush1.bf16.msra.mxu0 %v254
    %278 = vmatprep.subr.bf16.mxu0 0
    %279 = vmatpush2.bf16.msra.mxu0 0
    %280 = vmatprep.subr.bf16.mxu0 0
    %281 = vmatpush2.bf16.msra.mxu0 0
    %282 = vmatprep.subr.bf16.mxu0 0
    %283 = vmatpush2.bf16.msra.mxu0 0
    %284 = vmatprep.subr.bf16.mxu0 0
    %285 = vmatpush2.bf16.msra.mxu0 0
    %286 = vmatprep.subr.bf16.mxu0 0
    %287 = vmatpush2.bf16.msra.mxu0 0
    %288 = vmatprep.subr.bf16.mxu0 0
    %289 = vmatpush2.bf16.msra.mxu0 0
    %290 = vmatprep.subr.bf16.mxu0 0
    %291 = vmatpush2.bf16.msra.mxu0 0
    %292 = vmatprep.subr.bf16.mxu0 0
    %293 = vmatpush2.bf16.msra.mxu0 0
    %294 = vmatprep.mubr.bf16.mxu0 0
    %295 = vmatmul.mubr.bf16.gmra.mxu0 %v175
    %v296 = vpop.f32.mrf.mxu0
    %v297 = vadd.f32 0.0, %v296
    %v298 = vpop.f32.mrf.mxu0
    %v299 = vpop.f32.mrf.mxu0
    %v300 = vadd.f32 0.0, %v299
    %v301 = vpop.f32.mrf.mxu0
    %302 = vmatprep.mubr.bf16.mxu0 0
    %303 = vmatmul.mubr.bf16.gmra.mxu0 %v178
    %v304 = vpop.f32.mrf.mxu0
    %v305 = vadd.f32 0.0, %v304
    %v306 = vpop.f32.mrf.mxu0
    %v307 = vpop.f32.mrf.mxu0
    %v308 = vadd.f32 0.0, %v307
    %v309 = vpop.f32.mrf.mxu0
    %310 = vdwg.mxu0
    %v311 = vrot.slane %v215, 7
    %v312 = vrot.slane %v218, 7
    %v313 = vrot.slane %v223, 7
    %v314 = vrot.slane %v226, 7
    %vm315 = vcmp.lt.s32.totalorder %v58, 1
    %v316 = vsel %vm315, %v313, %v314
    %v317 = vsel %vm315, %v312, %v313
    %v318 = vsel %vm315, %v311, %v312
    %v319 = vsel %vm315, %v314, %v311
    %v320 = vsel %vm110, 1, 0
    %v321 = vsel %vm111, 1, 0
    %v322 = vsel %vm112, 1, 0
    %v323 = vsel %vm113, 1, 0
    %vm324 = vcmp.eq.s32.totalorder %v320, 1
    %vm325 = vcmp.eq.s32.totalorder %v321, 1
    %vm326 = vcmp.eq.s32.totalorder %v322, 1
    %vm327 = vcmp.eq.s32.totalorder %v323, 1
    %v328 = vsel %vm324, %v319, 0.0
    %v329 = vsel %vm325, %v318, 0.0
    %v330 = vsel %vm326, %v317, 0.0
    %v331 = vsel %vm327, %v316, 0.0
    %v340 = vunpack.c.l.b16 %v123
    %v341 = vunpack.c.l.b16 %v124
    %v342 = vunpack.c.l.b16 %v125
    %v343 = vunpack.c.l.b16 %v126
    %v344 = vunpack.c.l.b16 %v127
    %v345 = vunpack.c.l.b16 %v128
    %v346 = vunpack.c.l.b16 %v129
    %v347 = vunpack.c.l.b16 %v130
    %v348 = vpack.c.b16 %v341, %v340
    %v349 = vpack.c.b16 %v343, %v342
    %v350 = vpack.c.b16 %v345, %v344
    %v351 = vpack.c.b16 %v347, %v346
    %356 = vmatprep.subr.bf16.mxu0 0
    %357 = vmatpush1.bf16.msra.mxu0 0
    %358 = vmatprep.subr.bf16.mxu0 0
    %359 = vmatpush1.bf16.msra.mxu0 0
    %360 = vmatprep.subr.bf16.mxu0 0
    %361 = vmatpush1.bf16.msra.mxu0 0
    %362 = vmatprep.subr.bf16.mxu0 0
    %363 = vmatpush1.bf16.msra.mxu0 0
    %364 = vmatprep.subr.bf16.mxu0 0
    %365 = vmatpush1.bf16.msra.mxu0 %v351
    %366 = vmatprep.subr.bf16.mxu0 0
    %367 = vmatpush1.bf16.msra.mxu0 %v350
    %368 = vmatprep.subr.bf16.mxu0 0
    %369 = vmatpush1.bf16.msra.mxu0 %v349
    %370 = vmatprep.subr.bf16.mxu0 0
    %371 = vmatpush1.bf16.msra.mxu0 %v348
    %372 = vmatprep.subr.bf16.mxu0 0
    %373 = vmatpush2.bf16.msra.mxu0 0
    %374 = vmatprep.subr.bf16.mxu0 0
    %375 = vmatpush2.bf16.msra.mxu0 0
    %376 = vmatprep.subr.bf16.mxu0 0
    %377 = vmatpush2.bf16.msra.mxu0 0
    %378 = vmatprep.subr.bf16.mxu0 0
    %379 = vmatpush2.bf16.msra.mxu0 0
    %380 = vmatprep.subr.bf16.mxu0 0
    %381 = vmatpush2.bf16.msra.mxu0 0
    %382 = vmatprep.subr.bf16.mxu0 0
    %383 = vmatpush2.bf16.msra.mxu0 0
    %384 = vmatprep.subr.bf16.mxu0 0
    %385 = vmatpush2.bf16.msra.mxu0 0
    %386 = vmatprep.subr.bf16.mxu0 0
    %387 = vmatpush2.bf16.msra.mxu0 0
    %388 = vmatprep.mubr.bf16.mxu0 0
    %389 = vmatmul.mubr.bf16.gmra.mxu0 %v175
    %v390 = vpop.f32.mrf.mxu0
    %v391 = vadd.f32 %v328, %v390
    %v392 = vpop.f32.mrf.mxu0
    %v393 = vpop.f32.mrf.mxu0
    %v394 = vadd.f32 %v329, %v393
    %v395 = vpop.f32.mrf.mxu0
    %396 = vmatprep.mubr.bf16.mxu0 0
    %397 = vmatmul.mubr.bf16.gmra.mxu0 %v178
    %v398 = vpop.f32.mrf.mxu0
    %v399 = vadd.f32 %v330, %v398
    %v400 = vpop.f32.mrf.mxu0
    %v401 = vpop.f32.mrf.mxu0
    %v402 = vadd.f32 %v331, %v401
    %v403 = vpop.f32.mrf.mxu0
    %404 = vdwg.mxu0
    %v405 = vrot.slane %v297, 1
    %v406 = vrot.slane %v300, 1
    %v407 = vrot.slane %v305, 1
    %v408 = vrot.slane %v308, 1
    %vm409 = vcmp.lt.s32.totalorder %v58, 7
    %v410 = vsel %vm409, %v407, %v408
    %v411 = vsel %vm409, %v406, %v407
    %v412 = vsel %vm409, %v405, %v406
    %v413 = vsel %vm409, %v408, %v405
    %v414 = vsel %vm114, 1, 0
    %v415 = vsel %vm115, 1, 0
    %v416 = vsel %vm116, 1, 0
    %v417 = vsel %vm117, 1, 0
    %vm418 = vcmp.eq.s32.totalorder %v414, 1
    %vm419 = vcmp.eq.s32.totalorder %v415, 1
    %vm420 = vcmp.eq.s32.totalorder %v416, 1
    %vm421 = vcmp.eq.s32.totalorder %v417, 1
    %v422 = vsel %vm418, %v412, 0.0
    %v423 = vsel %vm419, %v411, 0.0
    %v424 = vsel %vm420, %v410, 0.0
    %v425 = vsel %vm421, %v413, 0.0
    %v426 = vadd.f32 %v391, %v422
    %v427 = vadd.f32 %v394, %v423
    %v428 = vadd.f32 %v399, %v424
    %v429 = vadd.f32 %v402, %v425
    %v430 = vadd.f32 %v426, %v427
    %v431 = vadd.f32 %v430, %v428
    %v432 = vadd.f32 %v431, %v429
    %v433 = vrot.slane %v432, 4
    %v434 = vadd.f32 %v432, %v433
    %v435 = vrot.slane %v434, 2
    %v436 = vadd.f32 %v434, %v435
    %v437 = vrot.slane %v436, 1
    %v438 = vadd.f32 %v436, %v437
    %v439 = vmul.f32 %v426, %v426
    %v440 = vmul.f32 %v427, %v427
    %v441 = vmul.f32 %v428, %v428
    %v442 = vmul.f32 %v429, %v429
    %v443 = vadd.f32 %v439, %v440
    %v444 = vadd.f32 %v443, %v441
    %v445 = vadd.f32 %v444, %v442
    %v446 = vrot.slane %v445, 4
    %v447 = vadd.f32 %v445, %v446
    %v448 = vrot.slane %v447, 2
    %v449 = vadd.f32 %v447, %v448
    %v450 = vrot.slane %v449, 1
    %v451 = vadd.f32 %v449, %v450
    %vm452 = vcmask 1040384
    %v453 = vsel %vm452, %v438, %v451
    %454 = vmatprep.subr.mxu0 0.0
    %455 = vmatpush1.msra.mxu0 %v54
    %456 = vmatprep.subr.mxu0 0.0
    %457 = vmatpush1.msra.mxu0 %v53
    %458 = vmatprep.subr.mxu0 0.0
    %459 = vmatpush1.msra.mxu0 %v52
    %460 = vmatprep.subr.mxu0 0.0
    %461 = vmatpush1.msra.mxu0 %v51
    %462 = vmatprep.subr.mxu0 0.0
    %463 = vmatpush1.msra.mxu0 %v50
    %464 = vmatprep.subr.mxu0 0.0
    %465 = vmatpush1.msra.mxu0 %v49
    %466 = vmatprep.subr.mxu0 0.0
    %467 = vmatpush1.msra.mxu0 %v48
    %468 = vmatprep.subr.mxu0 0.0
    %469 = vmatpush1.msra.mxu0 %v47
    %470 = vmatprep.subr.mxu0 0.0
    %471 = vmatpush1.msra.mxu0 %v46
    %472 = vmatprep.subr.mxu0 0.0
    %473 = vmatpush1.msra.mxu0 %v45
    %474 = vmatprep.subr.mxu0 0.0
    %475 = vmatpush1.msra.mxu0 %v44
    %476 = vmatprep.subr.mxu0 0.0
    %477 = vmatpush1.msra.mxu0 %v43
    %478 = vmatprep.subr.mxu0 0.0
    %479 = vmatpush1.msra.mxu0 %v42
    %480 = vmatprep.subr.mxu0 0.0
    %481 = vmatpush1.msra.mxu0 %v41
    %482 = vmatprep.subr.mxu0 0.0
    %483 = vmatpush1.msra.mxu0 %v40
    %484 = vmatprep.subr.mxu0 0.0
    %485 = vmatpush1.msra.mxu0 %v39
    %486 = vmatprep.subr.mxu0 0.0
    %487 = vmatpush2.msra.mxu0 0.0
    %488 = vmatprep.subr.mxu0 0.0
    %489 = vmatpush2.msra.mxu0 0.0
    %490 = vmatprep.subr.mxu0 0.0
    %491 = vmatpush2.msra.mxu0 0.0
    %492 = vmatprep.subr.mxu0 0.0
    %493 = vmatpush2.msra.mxu0 0.0
    %494 = vmatprep.subr.mxu0 0.0
    %495 = vmatpush2.msra.mxu0 0.0
    %496 = vmatprep.subr.mxu0 0.0
    %497 = vmatpush2.msra.mxu0 0.0
    %498 = vmatprep.subr.mxu0 0.0
    %499 = vmatpush2.msra.mxu0 0.0
    %500 = vmatprep.subr.mxu0 0.0
    %501 = vmatpush2.msra.mxu0 0.0
    %502 = vmatprep.subr.mxu0 0.0
    %503 = vmatpush2.msra.mxu0 0.0
    %504 = vmatprep.subr.mxu0 0.0
    %505 = vmatpush2.msra.mxu0 0.0
    %506 = vmatprep.subr.mxu0 0.0
    %507 = vmatpush2.msra.mxu0 0.0
    %508 = vmatprep.subr.mxu0 0.0
    %509 = vmatpush2.msra.mxu0 0.0
    %510 = vmatprep.subr.mxu0 0.0
    %511 = vmatpush2.msra.mxu0 0.0
    %512 = vmatprep.subr.mxu0 0.0
    %513 = vmatpush2.msra.mxu0 0.0
    %514 = vmatprep.subr.mxu0 0.0
    %515 = vmatpush2.msra.mxu0 0.0
    %516 = vmatprep.subr.mxu0 0.0
    %517 = vmatpush2.msra.mxu0 0.0
    %518 = vmatprep.mubr.f32.mxu0 0.0
    %519 = vmatmul.mubr.f32.gmra.mxu0 %v453
    %v520 = vpop.f32.mrf.mxu0
    %v521 = vadd.f32 0.0, %v520
    %v522 = vpop.f32.mrf.mxu0
    %523 = vdwg.mxu0
    %v524 = vmul.f32 %v521, 0.001953125
    %v525 = vmul.f32 %v524, %v524
    %v527 = vrot.slane %v525, 7
    %v529 = vsub.f32 %v524, %v527
    %v530 = vmax.f32 %v529, 0.0
    %v531 = vadd.f32 %v530, 1e-05
    %v532 = vrsqrt.pop %v531
    %v534 = vrot.slane %v532, 1
    %v536 = vmul.f32 %v56, %v534
    %v537 = vmul.f32 %v524, %v536
    %v539 = vrot.slane %v537, 7
    %v541 = vsub.f32 %v56, %v539
    %v542 = vsel %vm452, %v536, %v541
    %vm543 = vcmask 64512
    %v545 = vsel %vm543, %v542, 0
    %547 = vmatprep.subr.mxu0 0.0
    %548 = vmatpush1.msra.mxu0 0.0
    %549 = vmatprep.subr.mxu0 0.0
    %550 = vmatpush1.msra.mxu0 0.0
    %551 = vmatprep.subr.mxu0 0.0
    %552 = vmatpush1.msra.mxu0 0.0
    %553 = vmatprep.subr.mxu0 0.0
    %554 = vmatpush1.msra.mxu0 0.0
    %555 = vmatprep.subr.mxu0 0.0
    %556 = vmatpush1.msra.mxu0 0.0
    %557 = vmatprep.subr.mxu0 0.0
    %558 = vmatpush1.msra.mxu0 0.0
    %559 = vmatprep.subr.mxu0 0.0
    %560 = vmatpush1.msra.mxu0 0.0
    %561 = vmatprep.subr.mxu0 0.0
    %562 = vmatpush1.msra.mxu0 0.0
    %563 = vmatprep.subr.mxu0 0.0
    %564 = vmatpush1.msra.mxu0 0.0
    %565 = vmatprep.subr.mxu0 0.0
    %566 = vmatpush1.msra.mxu0 0.0
    %567 = vmatprep.subr.mxu0 0.0
    %568 = vmatpush1.msra.mxu0 0.0
    %569 = vmatprep.subr.mxu0 0.0
    %570 = vmatpush1.msra.mxu0 0.0
    %571 = vmatprep.subr.mxu0 0.0
    %572 = vmatpush1.msra.mxu0 0.0
    %573 = vmatprep.subr.mxu0 0.0
    %574 = vmatpush1.msra.mxu0 0.0
    %575 = vmatprep.subr.mxu0 0.0
    %576 = vmatpush1.msra.mxu0 0.0
    %577 = vmatprep.subr.mxu0 0.0
    %578 = vmatpush1.msra.mxu0 %v55
    %579 = vmatprep.subr.mxu0 0.0
    %580 = vmatpush2.msra.mxu0 0.0
    %581 = vmatprep.subr.mxu0 0.0
    %582 = vmatpush2.msra.mxu0 0.0
    %583 = vmatprep.subr.mxu0 0.0
    %584 = vmatpush2.msra.mxu0 0.0
    %585 = vmatprep.subr.mxu0 0.0
    %586 = vmatpush2.msra.mxu0 0.0
    %587 = vmatprep.subr.mxu0 0.0
    %588 = vmatpush2.msra.mxu0 0.0
    %589 = vmatprep.subr.mxu0 0.0
    %590 = vmatpush2.msra.mxu0 0.0
    %591 = vmatprep.subr.mxu0 0.0
    %592 = vmatpush2.msra.mxu0 0.0
    %593 = vmatprep.subr.mxu0 0.0
    %594 = vmatpush2.msra.mxu0 0.0
    %595 = vmatprep.subr.mxu0 0.0
    %596 = vmatpush2.msra.mxu0 0.0
    %597 = vmatprep.subr.mxu0 0.0
    %598 = vmatpush2.msra.mxu0 0.0
    %599 = vmatprep.subr.mxu0 0.0
    %600 = vmatpush2.msra.mxu0 0.0
    %601 = vmatprep.subr.mxu0 0.0
    %602 = vmatpush2.msra.mxu0 0.0
    %603 = vmatprep.subr.mxu0 0.0
    %604 = vmatpush2.msra.mxu0 0.0
    %605 = vmatprep.subr.mxu0 0.0
    %606 = vmatpush2.msra.mxu0 0.0
    %607 = vmatprep.subr.mxu0 0.0
    %608 = vmatpush2.msra.mxu0 0.0
    %609 = vmatprep.subr.mxu0 0.0
    %610 = vmatpush2.msra.mxu0 0.0
    %611 = vmatprep.mubr.f32.mxu0 0.0
    %612 = vmatmul.mubr.f32.gmra.mxu0 %v545
    %v613 = vpop.f32.mrf.mxu0
    %v614 = vadd.f32 0.0, %v613
    %v615 = vpop.f32.mrf.mxu0
    %616 = vdwg.mxu0
    %v617 = vlaneseq
    %v618 = vshrl.u32 %v617, 7
    %v619 = vsub.s32 0, %v618
    %v620 = vrot.slane %v614, %v619
    %v621 = vmul.f32 %v426, %v620
    %v622 = vmul.f32 %v427, %v620
    %v623 = vmul.f32 %v428, %v620
    %v624 = vmul.f32 %v429, %v620
    %v625 = vlaneseq
    %v626 = vshrl.u32 %v625, 7
    %v627 = vsub.s32 1, %v626
    %v628 = vrot.slane %v614, %v627
    %v629 = vadd.f32 %v621, %v628
    %v630 = vadd.f32 %v622, %v628
    %v631 = vadd.f32 %v623, %v628
    %v632 = vadd.f32 %v624, %v628
    %v633 = vmax.f32 %v629, 0.0
    %v634 = vmax.f32 %v630, 0.0
    %v635 = vmax.f32 %v631, 0.0
    %v636 = vmax.f32 %v632, 0.0
    %v637 = vpack.c.bf16 %v634, %v633
    %v638 = vpack.c.bf16 %v636, %v635
    %s639 = scalar_lea.vmem [#allocation2], 64
    %v640 = vld [vmem:[%s639] sm:$0xf]
    %v641 = vld [vmem:[%s639 + $0x4] sm:$0xf]
    %v642 = vld [vmem:[%s639 + $0x8] sm:$0xf]
    %v643 = vld [vmem:[%s639 + $0xc] sm:$0xf]
    %v644 = vld [vmem:[%s639 + $0x10] sm:$0xf]
    %v645 = vld [vmem:[%s639 + $0x14] sm:$0xf]
    %v646 = vld [vmem:[%s639 + $0x18] sm:$0xf]
    %v647 = vld [vmem:[%s639 + $0x1c] sm:$0xf]
    %v648 = vld [vmem:[%s639 + $0x20] sm:$0xf]
    %v649 = vld [vmem:[%s639 + $0x24] sm:$0xf]
    %v650 = vld [vmem:[%s639 + $0x28] sm:$0xf]
    %v651 = vld [vmem:[%s639 + $0x2c] sm:$0xf]
    %v652 = vld [vmem:[%s639 + $0x30] sm:$0xf]
    %v653 = vld [vmem:[%s639 + $0x34] sm:$0xf]
    %v654 = vld [vmem:[%s639 + $0x38] sm:$0xf]
    %v655 = vld [vmem:[%s639 + $0x3c] sm:$0xf]
    %v656 = vld [vmem:[#allocation2] sm:$0xf]
    %v657 = vld [vmem:[#allocation2 + $0x4] sm:$0xf]
    %v658 = vld [vmem:[#allocation2 + $0x8] sm:$0xf]
    %v659 = vld [vmem:[#allocation2 + $0xc] sm:$0xf]
    %v660 = vld [vmem:[#allocation2 + $0x10] sm:$0xf]
    %v661 = vld [vmem:[#allocation2 + $0x14] sm:$0xf]
    %v662 = vld [vmem:[#allocation2 + $0x18] sm:$0xf]
    %v663 = vld [vmem:[#allocation2 + $0x1c] sm:$0xf]
    %v664 = vld [vmem:[#allocation2 + $0x20] sm:$0xf]
    %v665 = vld [vmem:[#allocation2 + $0x24] sm:$0xf]
    %v666 = vld [vmem:[#allocation2 + $0x28] sm:$0xf]
    %v667 = vld [vmem:[#allocation2 + $0x2c] sm:$0xf]
    %v668 = vld [vmem:[#allocation2 + $0x30] sm:$0xf]
    %v669 = vld [vmem:[#allocation2 + $0x34] sm:$0xf]
    %v670 = vld [vmem:[#allocation2 + $0x38] sm:$0xf]
    %v671 = vld [vmem:[#allocation2 + $0x3c] sm:$0xf]
    %v688 = vunpack.c.l.b16 %v656
    %v689 = vunpack.c.l.b16 %v657
    %v690 = vunpack.c.l.b16 %v658
    %v691 = vunpack.c.l.b16 %v659
    %v692 = vunpack.c.l.b16 %v660
    %v693 = vunpack.c.l.b16 %v661
    %v694 = vunpack.c.l.b16 %v662
    %v695 = vunpack.c.l.b16 %v663
    %v696 = vunpack.c.l.b16 %v664
    %v697 = vunpack.c.l.b16 %v665
    %v698 = vunpack.c.l.b16 %v666
    %v699 = vunpack.c.l.b16 %v667
    %v700 = vunpack.c.l.b16 %v668
    %v701 = vunpack.c.l.b16 %v669
    %v702 = vunpack.c.l.b16 %v670
    %v703 = vunpack.c.l.b16 %v671
    %v704 = vpack.c.b16 %v689, %v688
    %v705 = vpack.c.b16 %v691, %v690
    %v706 = vpack.c.b16 %v693, %v692
    %v707 = vpack.c.b16 %v695, %v694
    %v708 = vpack.c.b16 %v697, %v696
    %v709 = vpack.c.b16 %v699, %v698
    %v710 = vpack.c.b16 %v701, %v700
    %v711 = vpack.c.b16 %v703, %v702
    %720 = vmatprep.subr.bf16.mxu0 0
    %721 = vmatpush1.bf16.msra.mxu0 %v711
    %722 = vmatprep.subr.bf16.mxu0 0
    %723 = vmatpush1.bf16.msra.mxu0 %v710
    %724 = vmatprep.subr.bf16.mxu0 0
    %725 = vmatpush1.bf16.msra.mxu0 %v709
    %726 = vmatprep.subr.bf16.mxu0 0
    %727 = vmatpush1.bf16.msra.mxu0 %v708
    %728 = vmatprep.subr.bf16.mxu0 0
    %729 = vmatpush1.bf16.msra.mxu0 %v707
    %730 = vmatprep.subr.bf16.mxu0 0
    %731 = vmatpush1.bf16.msra.mxu0 %v706
    %732 = vmatprep.subr.bf16.mxu0 0
    %733 = vmatpush1.bf16.msra.mxu0 %v705
    %734 = vmatprep.subr.bf16.mxu0 0
    %735 = vmatpush1.bf16.msra.mxu0 %v704
    %736 = vmatprep.subr.bf16.mxu0 0
    %737 = vmatpush2.bf16.msra.mxu0 0
    %738 = vmatprep.subr.bf16.mxu0 0
    %739 = vmatpush2.bf16.msra.mxu0 0
    %740 = vmatprep.subr.bf16.mxu0 0
    %741 = vmatpush2.bf16.msra.mxu0 0
    %742 = vmatprep.subr.bf16.mxu0 0
    %743 = vmatpush2.bf16.msra.mxu0 0
    %744 = vmatprep.subr.bf16.mxu0 0
    %745 = vmatpush2.bf16.msra.mxu0 0
    %746 = vmatprep.subr.bf16.mxu0 0
    %747 = vmatpush2.bf16.msra.mxu0 0
    %748 = vmatprep.subr.bf16.mxu0 0
    %749 = vmatpush2.bf16.msra.mxu0 0
    %750 = vmatprep.subr.bf16.mxu0 0
    %751 = vmatpush2.bf16.msra.mxu0 0
    %752 = vmatprep.mubr.bf16.mxu0 0
    %753 = vmatmul.mubr.bf16.gmra.mxu0 %v637
    %v754 = vpop.f32.mrf.mxu0
    %v755 = vadd.f32 0.0, %v754
    %v756 = vpop.f32.mrf.mxu0
    %v757 = vpop.f32.mrf.mxu0
    %v758 = vadd.f32 0.0, %v757
    %v759 = vpop.f32.mrf.mxu0
    %760 = vmatprep.mubr.bf16.mxu0 0
    %761 = vmatmul.mubr.bf16.gmra.mxu0 %v638
    %v762 = vpop.f32.mrf.mxu0
    %v763 = vadd.f32 0.0, %v762
    %v764 = vpop.f32.mrf.mxu0
    %v765 = vpop.f32.mrf.mxu0
    %v766 = vadd.f32 0.0, %v765
    %v767 = vpop.f32.mrf.mxu0
    %768 = vdwg.mxu0
    %s769 = scalar_lea.vmem [#allocation2], 128
    %v770 = vld [vmem:[%s769] sm:$0xf]
    %v771 = vld [vmem:[%s769 + $0x4] sm:$0xf]
    %v772 = vld [vmem:[%s769 + $0x8] sm:$0xf]
    %v773 = vld [vmem:[%s769 + $0xc] sm:$0xf]
    %v774 = vld [vmem:[%s769 + $0x10] sm:$0xf]
    %v775 = vld [vmem:[%s769 + $0x14] sm:$0xf]
    %v776 = vld [vmem:[%s769 + $0x18] sm:$0xf]
    %v777 = vld [vmem:[%s769 + $0x1c] sm:$0xf]
    %v778 = vld [vmem:[%s769 + $0x20] sm:$0xf]
    %v779 = vld [vmem:[%s769 + $0x24] sm:$0xf]
    %v780 = vld [vmem:[%s769 + $0x28] sm:$0xf]
    %v781 = vld [vmem:[%s769 + $0x2c] sm:$0xf]
    %v782 = vld [vmem:[%s769 + $0x30] sm:$0xf]
    %v783 = vld [vmem:[%s769 + $0x34] sm:$0xf]
    %v784 = vld [vmem:[%s769 + $0x38] sm:$0xf]
    %v785 = vld [vmem:[%s769 + $0x3c] sm:$0xf]
    %v802 = vunpack.c.l.b16 %v770
    %v803 = vunpack.c.l.b16 %v771
    %v804 = vunpack.c.l.b16 %v772
    %v805 = vunpack.c.l.b16 %v773
    %v806 = vunpack.c.l.b16 %v774
    %v807 = vunpack.c.l.b16 %v775
    %v808 = vunpack.c.l.b16 %v776
    %v809 = vunpack.c.l.b16 %v777
    %v810 = vunpack.c.l.b16 %v778
    %v811 = vunpack.c.l.b16 %v779
    %v812 = vunpack.c.l.b16 %v780
    %v813 = vunpack.c.l.b16 %v781
    %v814 = vunpack.c.l.b16 %v782
    %v815 = vunpack.c.l.b16 %v783
    %v816 = vunpack.c.l.b16 %v784
    %v817 = vunpack.c.l.b16 %v785
    %v818 = vpack.c.b16 %v803, %v802
    %v819 = vpack.c.b16 %v805, %v804
    %v820 = vpack.c.b16 %v807, %v806
    %v821 = vpack.c.b16 %v809, %v808
    %v822 = vpack.c.b16 %v811, %v810
    %v823 = vpack.c.b16 %v813, %v812
    %v824 = vpack.c.b16 %v815, %v814
    %v825 = vpack.c.b16 %v817, %v816
    %834 = vmatprep.subr.bf16.mxu0 0
    %835 = vmatpush1.bf16.msra.mxu0 %v825
    %836 = vmatprep.subr.bf16.mxu0 0
    %837 = vmatpush1.bf16.msra.mxu0 %v824
    %838 = vmatprep.subr.bf16.mxu0 0
    %839 = vmatpush1.bf16.msra.mxu0 %v823
    %840 = vmatprep.subr.bf16.mxu0 0
    %841 = vmatpush1.bf16.msra.mxu0 %v822
    %842 = vmatprep.subr.bf16.mxu0 0
    %843 = vmatpush1.bf16.msra.mxu0 %v821
    %844 = vmatprep.subr.bf16.mxu0 0
    %845 = vmatpush1.bf16.msra.mxu0 %v820
    %846 = vmatprep.subr.bf16.mxu0 0
    %847 = vmatpush1.bf16.msra.mxu0 %v819
    %848 = vmatprep.subr.bf16.mxu0 0
    %849 = vmatpush1.bf16.msra.mxu0 %v818
    %850 = vmatprep.subr.bf16.mxu0 0
    %851 = vmatpush2.bf16.msra.mxu0 0
    %852 = vmatprep.subr.bf16.mxu0 0
    %853 = vmatpush2.bf16.msra.mxu0 0
    %854 = vmatprep.subr.bf16.mxu0 0
    %855 = vmatpush2.bf16.msra.mxu0 0
    %856 = vmatprep.subr.bf16.mxu0 0
    %857 = vmatpush2.bf16.msra.mxu0 0
    %858 = vmatprep.subr.bf16.mxu0 0
    %859 = vmatpush2.bf16.msra.mxu0 0
    %860 = vmatprep.subr.bf16.mxu0 0
    %861 = vmatpush2.bf16.msra.mxu0 0
    %862 = vmatprep.subr.bf16.mxu0 0
    %863 = vmatpush2.bf16.msra.mxu0 0
    %864 = vmatprep.subr.bf16.mxu0 0
    %865 = vmatpush2.bf16.msra.mxu0 0
    %866 = vmatprep.mubr.bf16.mxu0 0
    %867 = vmatmul.mubr.bf16.gmra.mxu0 %v637
    %v868 = vpop.f32.mrf.mxu0
    %v869 = vadd.f32 0.0, %v868
    %v870 = vpop.f32.mrf.mxu0
    %v871 = vpop.f32.mrf.mxu0
    %v872 = vadd.f32 0.0, %v871
    %v873 = vpop.f32.mrf.mxu0
    %874 = vmatprep.mubr.bf16.mxu0 0
    %875 = vmatmul.mubr.bf16.gmra.mxu0 %v638
    %v876 = vpop.f32.mrf.mxu0
    %v877 = vadd.f32 0.0, %v876
    %v878 = vpop.f32.mrf.mxu0
    %v879 = vpop.f32.mrf.mxu0
    %v880 = vadd.f32 0.0, %v879
    %v881 = vpop.f32.mrf.mxu0
    %882 = vdwg.mxu0
    %v883 = vrot.slane %v755, 7
    %v884 = vrot.slane %v758, 7
    %v885 = vrot.slane %v763, 7
    %v886 = vrot.slane %v766, 7
    %v887 = vsel %vm315, %v885, %v886
    %v888 = vsel %vm315, %v884, %v885
    %v889 = vsel %vm315, %v883, %v884
    %v890 = vsel %vm315, %v886, %v883
    %v891 = vsel %vm324, %v890, 0.0
    %v892 = vsel %vm325, %v889, 0.0
    %v893 = vsel %vm326, %v888, 0.0
    %v894 = vsel %vm327, %v887, 0.0
    %v911 = vunpack.c.l.b16 %v640
    %v912 = vunpack.c.l.b16 %v641
    %v913 = vunpack.c.l.b16 %v642
    %v914 = vunpack.c.l.b16 %v643
    %v915 = vunpack.c.l.b16 %v644
    %v916 = vunpack.c.l.b16 %v645
    %v917 = vunpack.c.l.b16 %v646
    %v918 = vunpack.c.l.b16 %v647
    %v919 = vunpack.c.l.b16 %v648
    %v920 = vunpack.c.l.b16 %v649
    %v921 = vunpack.c.l.b16 %v650
    %v922 = vunpack.c.l.b16 %v651
    %v923 = vunpack.c.l.b16 %v652
    %v924 = vunpack.c.l.b16 %v653
    %v925 = vunpack.c.l.b16 %v654
    %v926 = vunpack.c.l.b16 %v655
    %v927 = vpack.c.b16 %v912, %v911
    %v928 = vpack.c.b16 %v914, %v913
    %v929 = vpack.c.b16 %v916, %v915
    %v930 = vpack.c.b16 %v918, %v917
    %v931 = vpack.c.b16 %v920, %v919
    %v932 = vpack.c.b16 %v922, %v921
    %v933 = vpack.c.b16 %v924, %v923
    %v934 = vpack.c.b16 %v926, %v925
    %943 = vmatprep.subr.bf16.mxu0 0
    %944 = vmatpush1.bf16.msra.mxu0 %v934
    %945 = vmatprep.subr.bf16.mxu0 0
    %946 = vmatpush1.bf16.msra.mxu0 %v933
    %947 = vmatprep.subr.bf16.mxu0 0
    %948 = vmatpush1.bf16.msra.mxu0 %v932
    %949 = vmatprep.subr.bf16.mxu0 0
    %950 = vmatpush1.bf16.msra.mxu0 %v931
    %951 = vmatprep.subr.bf16.mxu0 0
    %952 = vmatpush1.bf16.msra.mxu0 %v930
    %953 = vmatprep.subr.bf16.mxu0 0
    %954 = vmatpush1.bf16.msra.mxu0 %v929
    %955 = vmatprep.subr.bf16.mxu0 0
    %956 = vmatpush1.bf16.msra.mxu0 %v928
    %957 = vmatprep.subr.bf16.mxu0 0
    %958 = vmatpush1.bf16.msra.mxu0 %v927
    %959 = vmatprep.subr.bf16.mxu0 0
    %960 = vmatpush2.bf16.msra.mxu0 0
    %961 = vmatprep.subr.bf16.mxu0 0
    %962 = vmatpush2.bf16.msra.mxu0 0
    %963 = vmatprep.subr.bf16.mxu0 0
    %964 = vmatpush2.bf16.msra.mxu0 0
    %965 = vmatprep.subr.bf16.mxu0 0
    %966 = vmatpush2.bf16.msra.mxu0 0
    %967 = vmatprep.subr.bf16.mxu0 0
    %968 = vmatpush2.bf16.msra.mxu0 0
    %969 = vmatprep.subr.bf16.mxu0 0
    %970 = vmatpush2.bf16.msra.mxu0 0
    %971 = vmatprep.subr.bf16.mxu0 0
    %972 = vmatpush2.bf16.msra.mxu0 0
    %973 = vmatprep.subr.bf16.mxu0 0
    %974 = vmatpush2.bf16.msra.mxu0 0
    %975 = vmatprep.mubr.bf16.mxu0 0
    %976 = vmatmul.mubr.bf16.gmra.mxu0 %v637
    %v977 = vpop.f32.mrf.mxu0
    %v978 = vadd.f32 %v891, %v977
    %v979 = vpop.f32.mrf.mxu0
    %v980 = vpop.f32.mrf.mxu0
    %v981 = vadd.f32 %v892, %v980
    %v982 = vpop.f32.mrf.mxu0
    %983 = vmatprep.mubr.bf16.mxu0 0
    %984 = vmatmul.mubr.bf16.gmra.mxu0 %v638
    %v985 = vpop.f32.mrf.mxu0
    %v986 = vadd.f32 %v893, %v985
    %v987 = vpop.f32.mrf.mxu0
    %v988 = vpop.f32.mrf.mxu0
    %v989 = vadd.f32 %v894, %v988
    %v990 = vpop.f32.mrf.mxu0
    %991 = vdwg.mxu0
    %v992 = vrot.slane %v869, 1
    %v993 = vrot.slane %v872, 1
    %v994 = vrot.slane %v877, 1
    %v995 = vrot.slane %v880, 1
    %v996 = vsel %vm409, %v994, %v995
    %v997 = vsel %vm409, %v993, %v994
    %v998 = vsel %vm409, %v992, %v993
    %v999 = vsel %vm409, %v995, %v992
    %v1000 = vsel %vm418, %v998, 0.0
    %v1001 = vsel %vm419, %v997, 0.0
    %v1002 = vsel %vm420, %v996, 0.0
    %v1003 = vsel %vm421, %v999, 0.0
    %v1004 = vadd.f32 %v978, %v1000
    %v1005 = vadd.f32 %v981, %v1001
    %v1006 = vadd.f32 %v986, %v1002
    %v1007 = vadd.f32 %v989, %v1003
    %v1008 = vadd.f32 %v1004, %v1005
    %v1009 = vadd.f32 %v1008, %v1006
    %v1010 = vadd.f32 %v1009, %v1007
    %v1011 = vrot.slane %v1010, 4
    %v1012 = vadd.f32 %v1010, %v1011
    %v1013 = vrot.slane %v1012, 2
    %v1014 = vadd.f32 %v1012, %v1013
    %v1015 = vrot.slane %v1014, 1
    %v1016 = vadd.f32 %v1014, %v1015
    %v1017 = vmul.f32 %v1004, %v1004
    %v1018 = vmul.f32 %v1005, %v1005
    %v1019 = vmul.f32 %v1006, %v1006
    %v1020 = vmul.f32 %v1007, %v1007
    %v1021 = vadd.f32 %v1017, %v1018
    %v1022 = vadd.f32 %v1021, %v1019
    %v1023 = vadd.f32 %v1022, %v1020
    %v1024 = vrot.slane %v1023, 4
    %v1025 = vadd.f32 %v1023, %v1024
    %v1026 = vrot.slane %v1025, 2
    %v1027 = vadd.f32 %v1025, %v1026
    %v1028 = vrot.slane %v1027, 1
    %v1029 = vadd.f32 %v1027, %v1028
    %v1030 = vsel %vm452, %v1016, %v1029
    %1031 = vmatprep.subr.mxu0 0.0
    %1032 = vmatpush1.msra.mxu0 %v54
    %1033 = vmatprep.subr.mxu0 0.0
    %1034 = vmatpush1.msra.mxu0 %v53
    %1035 = vmatprep.subr.mxu0 0.0
    %1036 = vmatpush1.msra.mxu0 %v52
    %1037 = vmatprep.subr.mxu0 0.0
    %1038 = vmatpush1.msra.mxu0 %v51
    %1039 = vmatprep.subr.mxu0 0.0
    %1040 = vmatpush1.msra.mxu0 %v50
    %1041 = vmatprep.subr.mxu0 0.0
    %1042 = vmatpush1.msra.mxu0 %v49
    %1043 = vmatprep.subr.mxu0 0.0
    %1044 = vmatpush1.msra.mxu0 %v48
    %1045 = vmatprep.subr.mxu0 0.0
    %1046 = vmatpush1.msra.mxu0 %v47
    %1047 = vmatprep.subr.mxu0 0.0
    %1048 = vmatpush1.msra.mxu0 %v46
    %1049 = vmatprep.subr.mxu0 0.0
    %1050 = vmatpush1.msra.mxu0 %v45
    %1051 = vmatprep.subr.mxu0 0.0
    %1052 = vmatpush1.msra.mxu0 %v44
    %1053 = vmatprep.subr.mxu0 0.0
    %1054 = vmatpush1.msra.mxu0 %v43
    %1055 = vmatprep.subr.mxu0 0.0
    %1056 = vmatpush1.msra.mxu0 %v42
    %1057 = vmatprep.subr.mxu0 0.0
    %1058 = vmatpush1.msra.mxu0 %v41
    %1059 = vmatprep.subr.mxu0 0.0
    %1060 = vmatpush1.msra.mxu0 %v40
    %1061 = vmatprep.subr.mxu0 0.0
    %1062 = vmatpush1.msra.mxu0 %v39
    %1063 = vmatprep.subr.mxu0 0.0
    %1064 = vmatpush2.msra.mxu0 0.0
    %1065 = vmatprep.subr.mxu0 0.0
    %1066 = vmatpush2.msra.mxu0 0.0
    %1067 = vmatprep.subr.mxu0 0.0
    %1068 = vmatpush2.msra.mxu0 0.0
    %1069 = vmatprep.subr.mxu0 0.0
    %1070 = vmatpush2.msra.mxu0 0.0
    %1071 = vmatprep.subr.mxu0 0.0
    %1072 = vmatpush2.msra.mxu0 0.0
    %1073 = vmatprep.subr.mxu0 0.0
    %1074 = vmatpush2.msra.mxu0 0.0
    %1075 = vmatprep.subr.mxu0 0.0
    %1076 = vmatpush2.msra.mxu0 0.0
    %1077 = vmatprep.subr.mxu0 0.0
    %1078 = vmatpush2.msra.mxu0 0.0
    %1079 = vmatprep.subr.mxu0 0.0
    %1080 = vmatpush2.msra.mxu0 0.0
    %1081 = vmatprep.subr.mxu0 0.0
    %1082 = vmatpush2.msra.mxu0 0.0
    %1083 = vmatprep.subr.mxu0 0.0
    %1084 = vmatpush2.msra.mxu0 0.0
    %1085 = vmatprep.subr.mxu0 0.0
    %1086 = vmatpush2.msra.mxu0 0.0
    %1087 = vmatprep.subr.mxu0 0.0
    %1088 = vmatpush2.msra.mxu0 0.0
    %1089 = vmatprep.subr.mxu0 0.0
    %1090 = vmatpush2.msra.mxu0 0.0
    %1091 = vmatprep.subr.mxu0 0.0
    %1092 = vmatpush2.msra.mxu0 0.0
    %1093 = vmatprep.subr.mxu0 0.0
    %1094 = vmatpush2.msra.mxu0 0.0
    %1095 = vmatprep.mubr.f32.mxu0 0.0
    %1096 = vmatmul.mubr.f32.gmra.mxu0 %v1030
    %v1097 = vpop.f32.mrf.mxu0
    %v1098 = vadd.f32 0.0, %v1097
    %v1099 = vpop.f32.mrf.mxu0
    %1100 = vdwg.mxu0
    %v1101 = vmul.f32 %v1098, 0.001953125
    %v1102 = vmul.f32 %v1101, %v1101
    %v1104 = vrot.slane %v1102, 7
    %v1106 = vsub.f32 %v1101, %v1104
    %v1107 = vmax.f32 %v1106, 0.0
    %v1108 = vadd.f32 %v1107, 1e-05
    %v1109 = vrsqrt.pop %v1108
    %v1111 = vrot.slane %v1109, 7
    %v1113 = vmul.f32 %v56, %v1111
    %v1115 = vrot.slane %v1113, 2
    %v1117 = vmul.f32 %v1101, %v1115
    %v1119 = vrot.slane %v1117, 5
    %v1121 = vsub.f32 %v56, %v1119
    %v1123 = vrot.slane %v1121, 2
    %v1125 = vsel %vm452, %v1115, %v1123
    %v1127 = vsel %vm543, %v1125, 0
    %1129 = vmatprep.subr.mxu0 0.0
    %1130 = vmatpush1.msra.mxu0 0.0
    %1131 = vmatprep.subr.mxu0 0.0
    %1132 = vmatpush1.msra.mxu0 0.0
    %1133 = vmatprep.subr.mxu0 0.0
    %1134 = vmatpush1.msra.mxu0 0.0
    %1135 = vmatprep.subr.mxu0 0.0
    %1136 = vmatpush1.msra.mxu0 0.0
    %1137 = vmatprep.subr.mxu0 0.0
    %1138 = vmatpush1.msra.mxu0 0.0
    %1139 = vmatprep.subr.mxu0 0.0
    %1140 = vmatpush1.msra.mxu0 0.0
    %1141 = vmatprep.subr.mxu0 0.0
    %1142 = vmatpush1.msra.mxu0 0.0
    %1143 = vmatprep.subr.mxu0 0.0
    %1144 = vmatpush1.msra.mxu0 0.0
    %1145 = vmatprep.subr.mxu0 0.0
    %1146 = vmatpush1.msra.mxu0 0.0
    %1147 = vmatprep.subr.mxu0 0.0
    %1148 = vmatpush1.msra.mxu0 0.0
    %1149 = vmatprep.subr.mxu0 0.0
    %1150 = vmatpush1.msra.mxu0 0.0
    %1151 = vmatprep.subr.mxu0 0.0
    %1152 = vmatpush1.msra.mxu0 0.0
    %1153 = vmatprep.subr.mxu0 0.0
    %1154 = vmatpush1.msra.mxu0 0.0
    %1155 = vmatprep.subr.mxu0 0.0
    %1156 = vmatpush1.msra.mxu0 0.0
    %1157 = vmatprep.subr.mxu0 0.0
    %1158 = vmatpush1.msra.mxu0 0.0
    %1159 = vmatprep.subr.mxu0 0.0
    %1160 = vmatpush1.msra.mxu0 %v55
    %1161 = vmatprep.subr.mxu0 0.0
    %1162 = vmatpush2.msra.mxu0 0.0
    %1163 = vmatprep.subr.mxu0 0.0
    %1164 = vmatpush2.msra.mxu0 0.0
    %1165 = vmatprep.subr.mxu0 0.0
    %1166 = vmatpush2.msra.mxu0 0.0
    %1167 = vmatprep.subr.mxu0 0.0
    %1168 = vmatpush2.msra.mxu0 0.0
    %1169 = vmatprep.subr.mxu0 0.0
    %1170 = vmatpush2.msra.mxu0 0.0
    %1171 = vmatprep.subr.mxu0 0.0
    %1172 = vmatpush2.msra.mxu0 0.0
    %1173 = vmatprep.subr.mxu0 0.0
    %1174 = vmatpush2.msra.mxu0 0.0
    %1175 = vmatprep.subr.mxu0 0.0
    %1176 = vmatpush2.msra.mxu0 0.0
    %1177 = vmatprep.subr.mxu0 0.0
    %1178 = vmatpush2.msra.mxu0 0.0
    %1179 = vmatprep.subr.mxu0 0.0
    %1180 = vmatpush2.msra.mxu0 0.0
    %1181 = vmatprep.subr.mxu0 0.0
    %1182 = vmatpush2.msra.mxu0 0.0
    %1183 = vmatprep.subr.mxu0 0.0
    %1184 = vmatpush2.msra.mxu0 0.0
    %1185 = vmatprep.subr.mxu0 0.0
    %1186 = vmatpush2.msra.mxu0 0.0
    %1187 = vmatprep.subr.mxu0 0.0
    %1188 = vmatpush2.msra.mxu0 0.0
    %1189 = vmatprep.subr.mxu0 0.0
    %1190 = vmatpush2.msra.mxu0 0.0
    %1191 = vmatprep.subr.mxu0 0.0
    %1192 = vmatpush2.msra.mxu0 0.0
    %1193 = vmatprep.mubr.f32.mxu0 0.0
    %1194 = vmatmul.mubr.f32.gmra.mxu0 %v1127
    %v1195 = vpop.f32.mrf.mxu0
    %v1196 = vadd.f32 0.0, %v1195
    %v1197 = vpop.f32.mrf.mxu0
    %1198 = vdwg.mxu0
    %v1199 = vlaneseq
    %v1200 = vshrl.u32 %v1199, 7
    %v1201 = vsub.s32 0, %v1200
    %v1202 = vrot.slane %v1196, %v1201
    %v1203 = vmul.f32 %v1004, %v1202
    %v1204 = vmul.f32 %v1005, %v1202
    %v1205 = vmul.f32 %v1006, %v1202
    %v1206 = vmul.f32 %v1007, %v1202
    %v1207 = vlaneseq
    %v1208 = vshrl.u32 %v1207, 7
    %v1209 = vsub.s32 1, %v1208
    %v1210 = vrot.slane %v1196, %v1209
    %v1211 = vadd.f32 %v1203, %v1210
    %v1212 = vadd.f32 %v1204, %v1210
    %v1213 = vadd.f32 %v1205, %v1210
    %v1214 = vadd.f32 %v1206, %v1210
    %v1215 = vmax.f32 %v1211, 0.0
    %v1216 = vmax.f32 %v1212, 0.0
    %v1217 = vmax.f32 %v1213, 0.0
    %v1218 = vmax.f32 %v1214, 0.0
    %v1219 = vmin.f32 %v1215, 6.0
    %v1220 = vmin.f32 %v1216, 6.0
    %v1221 = vmin.f32 %v1217, 6.0
    %v1222 = vmin.f32 %v1218, 6.0
    %1223 = vst [vmem:[#allocation5] sm:$0xff] %v1219
    %1224 = vst [vmem:[#allocation5 + $0x8] sm:$0xff] %v1220
    %1225 = vst [vmem:[#allocation5 + $0x10] sm:$0xff] %v1221
    %1226 = vst [vmem:[#allocation5 + $0x18] sm:$0xff] %v1222
    // Predicated region
    $region30: #{tpu_custom_call.1} parent=1 // pred_check
      _
    $region31: #{tpu_custom_call.1} parent=1 // pred_check_branch
      %1228 = sbr.rel (0) target = $region33
    $region32: #{tpu_custom_call.1} parent=1 // pred_region
      %s1230 = ssub.s32 512, 512
      %1231 = vsyncadd [#allocation4], %s1230
      %s1232 = sshll.u32 [#allocation5], 4
      %s1233 = int_to_ptr.vmem [resolvable:$true] %s1232
      %1238 = dma.vmem_to_hbm [thread:$0]  %s1233, 512, %s6, [#allocation4], 128, 128, 8
    $region33: #{tpu_custom_call.1} parent=1 // pred_fallthru
      _
    // Predicated region
    $region34: #{tpu_custom_call.1} parent=1 // pred_check
      _
    $region35: #{tpu_custom_call.1} parent=1 // pred_check_branch
      %1240 = sbr.rel (0) target = $region37
    $region36: #{tpu_custom_call.1} parent=1 // pred_region
      %1241 = dma.done [#allocation4], 512
    $region37: #{tpu_custom_call.1} parent=1 // pred_fallthru
      _
    %1242 = vsyncpa [#allocation3], 1
    %1243 = vsyncpa [#allocation4], 1

</llo_original>
